<compile_context>
chip_gen: v6e
topology: v6e:2x2x1
jax: 0.10.0
libtpu: 0.0.40
codegen_flags: <defaults>
</compile_context>

<pallas_src>
import jax
import jax.numpy as jnp
from jax.experimental import pallas as pl
from jax.experimental.pallas import tpu as pltpu

EPS = 1e-5


def _fused_kernel(x_ref, s_ref, w_ref, gamma_ref, beta_ref, o_ref):
    # x_ref:     (Cin, M)    channel-major activations (NCHW flattened, no transpose)
    # s_ref:     (1, Cin)    per-input-channel scale
    # w_ref:     (Cout, Cin) 1x1 conv weight (PyTorch OI layout, no transpose)
    # gamma/beta:(Cout, 1)
    # o_ref:     (Cout, M)
    ws = (w_ref[...] * s_ref[...]).astype(jnp.bfloat16)   # fold scale into weight (VPU)
    xb = x_ref[...].astype(jnp.bfloat16)
    # 1x1 conv == matmul on the MXU; bf16 inputs, f32 accumulation.
    y = jnp.dot(ws, xb, preferred_element_type=jnp.float32)

    m = y.shape[1]
    inv_m = 1.0 / m
    # One-pass batch statistics: sum and sum-of-squares (no diff temp).
    s1 = jnp.sum(y, axis=1, keepdims=True)                 # (Cout, 1)
    s2 = jnp.sum(y * y, axis=1, keepdims=True)             # (Cout, 1)
    mean = s1 * inv_m
    var = jnp.maximum(s2 * inv_m - mean * mean, 0.0)       # clamp cancellation
    inv = jax.lax.rsqrt(var + EPS)                         # EUP slot
    a = inv * gamma_ref[...]                               # (Cout, 1)
    b = beta_ref[...] - mean * a
    o_ref[...] = y * a + b                                 # single fused affine


def mul_conv1x1_bn(x_nchw, scale_nc11, conv_w, gamma, beta):
    """x_nchw: (N, Cin, H, W); scale_nc11: (1, Cin, 1, 1);
    conv_w: (Cout, Cin, 1, 1); gamma/beta: (Cout,). Returns (N, Cout, H, W)."""
    N, Cin, H, W = x_nchw.shape
    Cout = conv_w.shape[0]

    # Channel-major flatten. For N == 1 this is a pure metadata reshape
    # (no data movement); only the rare N > 1 path needs a transpose.
    if N == 1:
        x2d = x_nchw.reshape(Cin, H * W).astype(jnp.float32)
    else:
        x2d = jnp.transpose(x_nchw, (1, 0, 2, 3)).reshape(Cin, N * H * W)
        x2d = x2d.astype(jnp.float32)
    M = x2d.shape[1]

    s2d = scale_nc11.reshape(1, Cin).astype(jnp.float32)
    w2d = conv_w.reshape(Cout, Cin).astype(jnp.float32)        # no transpose
    g2d = gamma.reshape(Cout, 1).astype(jnp.float32)
    b2d = beta.reshape(Cout, 1).astype(jnp.float32)

    vmem = pltpu.MemorySpace.VMEM
    bytes_accessed = 4 * (Cin * M + Cin + Cout * Cin + 2 * Cout + Cout * M)

    out2d = pl.pallas_call(
        _fused_kernel,
        out_shape=jax.ShapeDtypeStruct((Cout, M), jnp.float32),
        in_specs=[
            pl.BlockSpec((Cin, M), lambda: (0, 0), memory_space=vmem),
            pl.BlockSpec((1, Cin), lambda: (0, 0), memory_space=vmem),
            pl.BlockSpec((Cout, Cin), lambda: (0, 0), memory_space=vmem),
            pl.BlockSpec((Cout, 1), lambda: (0, 0), memory_space=vmem),
            pl.BlockSpec((Cout, 1), lambda: (0, 0), memory_space=vmem),
        ],
        out_specs=pl.BlockSpec((Cout, M), lambda: (0, 0), memory_space=vmem),
        cost_estimate=pl.CostEstimate(
            flops=2 * Cout * Cin * M + 8 * Cout * M,
            transcendentals=Cout,
            bytes_accessed=bytes_accessed,
        ),
    )(x2d, s2d, w2d, g2d, b2d)

    # Back to NCHW — contiguous reshape for N == 1 (no transpose).
    if N == 1:
        return out2d.reshape(1, Cout, H, W)
    return jnp.transpose(out2d.reshape(Cout, N, H, W), (1, 0, 2, 3))


if __name__ == "__main__":
    key = jax.random.PRNGKey(0)
    k1, k2, k3 = jax.random.split(key, 3)

    # Shapes implied by the module's forward / __init__.
    N, Cin, H, W = 1, 768, 14, 14
    Cout = 128

    x254 = jax.random.normal(k1, (N, Cin, H, W), dtype=jnp.float32)
    x259 = jax.random.normal(k2, (1, Cin, 1, 1), dtype=jnp.float32)

    # Deterministic synthetic params (PyTorch BN defaults: gamma=1, beta=0).
    conv_w = jax.random.normal(k3, (Cout, Cin, 1, 1), dtype=jnp.float32) * 0.02
    gamma = jnp.ones((Cout,), dtype=jnp.float32)
    beta = jnp.zeros((Cout,), dtype=jnp.float32)

    out = mul_conv1x1_bn(x254, x259, conv_w, gamma, beta)
    out = jax.block_until_ready(out)
    assert out.shape == (N, Cout, H, W)

    # Pure-XLA f32 reference for sanity (same forward semantics).
    xs = x254 * x259
    y_ref = jax.lax.conv_general_dilated(xs, conv_w, (1, 1), "VALID")
    mean = jnp.mean(y_ref, axis=(0, 2, 3), keepdims=True)
    var = jnp.mean((y_ref - mean) ** 2, axis=(0, 2, 3), keepdims=True)
    ref = (y_ref - mean) * jax.lax.rsqrt(var + EPS)
    ref = ref * gamma.reshape(1, Cout, 1, 1) + beta.reshape(1, Cout, 1, 1)
    # bf16 MXU inputs (f32 accumulation) -> looser tolerance than pure f32.
    assert jnp.allclose(out, ref, atol=5e-2, rtol=5e-2)

    print("KERNEL_OK")
</pallas_src>

<mosaic_0001>
module attributes {stable_mosaic.version = 11 : i64} {
  func.func @_fused_kernel(%arg0: memref<768x196xf32, #tpu.memory_space<vmem>>, %arg1: memref<1x768xf32, #tpu.memory_space<vmem>>, %arg2: memref<128x768xf32, #tpu.memory_space<vmem>>, %arg3: memref<128x1xf32, #tpu.memory_space<vmem>>, %arg4: memref<128x1xf32, #tpu.memory_space<vmem>>, %arg5: memref<128x196xf32, #tpu.memory_space<vmem>>) attributes {dimension_semantics = [], scalar_prefetch = 0 : i64, scratch_operands = 0 : i64, tpu.core_type = #tpu.core_type<tc>} {
    %c0 = arith.constant 0 : index
    %c0_0 = arith.constant 0 : index
    %0 = vector.load %arg2[%c0, %c0_0] : memref<128x768xf32, #tpu.memory_space<vmem>>, vector<128x768xf32>
    %c0_1 = arith.constant 0 : index
    %c0_2 = arith.constant 0 : index
    %1 = vector.load %arg1[%c0_1, %c0_2] : memref<1x768xf32, #tpu.memory_space<vmem>>, vector<1x768xf32>
    %2 = vector.broadcast %1 : vector<1x768xf32> to vector<128x768xf32>
    %3 = arith.mulf %0, %2 : vector<128x768xf32>
    %4 = arith.truncf %3 : vector<128x768xf32> to vector<128x768xbf16>
    %c0_3 = arith.constant 0 : index
    %c0_4 = arith.constant 0 : index
    %5 = vector.load %arg0[%c0_3, %c0_4] : memref<768x196xf32, #tpu.memory_space<vmem>>, vector<768x196xf32>
    %6 = arith.truncf %5 : vector<768x196xf32> to vector<768x196xbf16>
    %cst = arith.constant dense<0.000000e+00> : vector<128x196xf32>
    %7 = tpu.matmul %4, %6, %cst {dimension_numbers = #tpu.dot_dimension_numbers<[1], [0], [0], [1], [0, 0, 1, 1], [], []>} : vector<128x768xbf16>, vector<768x196xbf16>, vector<128x196xf32> -> vector<128x196xf32>
    %cst_5 = arith.constant dense<0.000000e+00> : vector<128xf32>
    %8 = vector.multi_reduction <add>, %7, %cst_5 [1] : vector<128x196xf32> to vector<128xf32>
    %9 = vector.shape_cast %8 : vector<128xf32> to vector<128x1xf32>
    %10 = arith.mulf %7, %7 : vector<128x196xf32>
    %cst_6 = arith.constant dense<0.000000e+00> : vector<128xf32>
    %11 = vector.multi_reduction <add>, %10, %cst_6 [1] : vector<128x196xf32> to vector<128xf32>
    %12 = vector.shape_cast %11 : vector<128xf32> to vector<128x1xf32>
    %cst_7 = arith.constant 0.00510204071 : f32
    %13 = vector.broadcast %cst_7 : f32 to vector<128x1xf32>
    %14 = arith.mulf %9, %13 : vector<128x1xf32>
    %cst_8 = arith.constant 0.00510204071 : f32
    %15 = vector.broadcast %cst_8 : f32 to vector<128x1xf32>
    %16 = arith.mulf %12, %15 : vector<128x1xf32>
    %17 = arith.mulf %14, %14 : vector<128x1xf32>
    %18 = arith.subf %16, %17 : vector<128x1xf32>
    %cst_9 = arith.constant 0.000000e+00 : f32
    %19 = vector.broadcast %cst_9 : f32 to vector<128x1xf32>
    %20 = arith.maximumf %18, %19 : vector<128x1xf32>
    %cst_10 = arith.constant 9.99999974E-6 : f32
    %21 = vector.broadcast %cst_10 : f32 to vector<128x1xf32>
    %22 = arith.addf %20, %21 : vector<128x1xf32>
    %23 = math.rsqrt %22 : vector<128x1xf32>
    %c0_11 = arith.constant 0 : index
    %c0_12 = arith.constant 0 : index
    %24 = vector.load %arg3[%c0_11, %c0_12] : memref<128x1xf32, #tpu.memory_space<vmem>>, vector<128x1xf32>
    %25 = arith.mulf %23, %24 : vector<128x1xf32>
    %c0_13 = arith.constant 0 : index
    %c0_14 = arith.constant 0 : index
    %26 = vector.load %arg4[%c0_13, %c0_14] : memref<128x1xf32, #tpu.memory_space<vmem>>, vector<128x1xf32>
    %27 = arith.mulf %14, %25 : vector<128x1xf32>
    %28 = arith.subf %26, %27 : vector<128x1xf32>
    %29 = vector.broadcast %25 : vector<128x1xf32> to vector<128x196xf32>
    %30 = arith.mulf %7, %29 : vector<128x196xf32>
    %31 = vector.broadcast %28 : vector<128x1xf32> to vector<128x196xf32>
    %32 = arith.addf %30, %31 : vector<128x196xf32>
    %c0_15 = arith.constant 0 : index
    %c0_16 = arith.constant 0 : index
    %33 = vector.load %arg5[%c0_15, %c0_16] : memref<128x196xf32, #tpu.memory_space<vmem>>, vector<128x196xf32>
    tpu.vector_store %arg5[%c0_15, %c0_16], %32 {strides = array<i32>} : memref<128x196xf32, #tpu.memory_space<vmem>>, vector<128x196xf32>,
    return
  }
}

</mosaic_0001>

<llo_original>
// kernel: tpu_custom_call.1
$region0: #{tpu_custom_call.1}
  #allocation0 [shape = 'u32[]', space=smem, size = 0x4, offset = 0x4, fixed_abs, tag = 'smem constant byte address 0x4 - core index']
  #allocation1 [shape = 'u32[144,128]{1,0:T(1,128)}', space=vmem, size = 0x12000, scoped, tag = 'internal scratch']
  %s0 = inlined_call_operand.vmem [shape: f32[768,196], index: 0, kind: input, shape index: {}]
  %s1 = inlined_call_operand.vmem [shape: f32[1,768], index: 1, kind: input, shape index: {}]
  %s2 = inlined_call_operand.vmem [shape: f32[128,768], index: 2, kind: input, shape index: {}]
  %s3 = inlined_call_operand.vmem [shape: f32[128,1], index: 3, kind: input, shape index: {}]
  %s4 = inlined_call_operand.vmem [shape: f32[128,1], index: 4, kind: input, shape index: {}]
  %s5 = inlined_call_operand.vmem [shape: f32[128,196], index: 5, kind: output, shape index: {}]
  %s6 = sld [smem:[#allocation0]]
  $region30: #{tpu_custom_call.1} parent=0
    _
  %s8 = ssub.s32 1, %s6
  %s9 = scalar_select 0, %s8, %s6
  // Predicated region
  $region2: #{tpu_custom_call.1} parent=0 // pred_check
    _
  $region3: #{tpu_custom_call.1} parent=0 // pred_check_branch
    %11 = sbr.rel (0) target = $region5
  $region4: #{tpu_custom_call.1} parent=0 // pred_region
    _
  $region5: #{tpu_custom_call.1} parent=0 // pred_fallthru
    _
  // Predicated region
  $region6: #{tpu_custom_call.1} parent=0 // pred_check
    _
  $region7: #{tpu_custom_call.1} parent=0 // pred_check_branch
    %13 = sbr.rel (0) target = $region9
  $region8: #{tpu_custom_call.1} parent=0 // pred_region
    _
  $region9: #{tpu_custom_call.1} parent=0 // pred_fallthru
    _
  // Predicated region
  $region10: #{tpu_custom_call.1} parent=0 // pred_check
    _
  $region11: #{tpu_custom_call.1} parent=0 // pred_check_branch
    %15 = sbr.rel (0) target = $region13
  $region12: #{tpu_custom_call.1} parent=0 // pred_region
    _
  $region13: #{tpu_custom_call.1} parent=0 // pred_fallthru
    _
  // Predicated region
  $region14: #{tpu_custom_call.1} parent=0 // pred_check
    _
  $region15: #{tpu_custom_call.1} parent=0 // pred_check_branch
    %17 = sbr.rel (0) target = $region17
  $region16: #{tpu_custom_call.1} parent=0 // pred_region
    _
  $region17: #{tpu_custom_call.1} parent=0 // pred_fallthru
    _
  // Predicated region
  $region18: #{tpu_custom_call.1} parent=0 // pred_check
    _
  $region19: #{tpu_custom_call.1} parent=0 // pred_check_branch
    %19 = sbr.rel (0) target = $region21
  $region20: #{tpu_custom_call.1} parent=0 // pred_region
    _
  $region21: #{tpu_custom_call.1} parent=0 // pred_fallthru
    _
  %v20 = vld [vmem:[%s2] sm:$0xff]
  %v21 = vld [vmem:[%s2 + $0x8] sm:$0xff]
  %v22 = vld [vmem:[%s2 + $0x10] sm:$0xff]
  %v23 = vld [vmem:[%s2 + $0x18] sm:$0xff]
  %v24 = vld [vmem:[%s2 + $0x20] sm:$0xff]
  %v25 = vld [vmem:[%s2 + $0x28] sm:$0xff]
  %v26 = vld [vmem:[%s2 + $0x30] sm:$0xff]
  %v27 = vld [vmem:[%s2 + $0x38] sm:$0xff]
  %v28 = vld [vmem:[%s2 + $0x40] sm:$0xff]
  %v29 = vld [vmem:[%s2 + $0x48] sm:$0xff]
  %v30 = vld [vmem:[%s2 + $0x50] sm:$0xff]
  %v31 = vld [vmem:[%s2 + $0x58] sm:$0xff]
  %v32 = vld [vmem:[%s2 + $0x60] sm:$0xff]
  %v33 = vld [vmem:[%s2 + $0x68] sm:$0xff]
  %v34 = vld [vmem:[%s2 + $0x70] sm:$0xff]
  %v35 = vld [vmem:[%s2 + $0x78] sm:$0xff]
  %v36 = vld [vmem:[%s2 + $0x80] sm:$0xff]
  %v37 = vld [vmem:[%s2 + $0x88] sm:$0xff]
  %v38 = vld [vmem:[%s2 + $0x90] sm:$0xff]
  %v39 = vld [vmem:[%s2 + $0x98] sm:$0xff]
  %v40 = vld [vmem:[%s2 + $0xa0] sm:$0xff]
  %v41 = vld [vmem:[%s2 + $0xa8] sm:$0xff]
  %v42 = vld [vmem:[%s2 + $0xb0] sm:$0xff]
  %v43 = vld [vmem:[%s2 + $0xb8] sm:$0xff]
  %v44 = vld [vmem:[%s2 + $0xc0] sm:$0xff]
  %v45 = vld [vmem:[%s2 + $0xc8] sm:$0xff]
  %v46 = vld [vmem:[%s2 + $0xd0] sm:$0xff]
  %v47 = vld [vmem:[%s2 + $0xd8] sm:$0xff]
  %v48 = vld [vmem:[%s2 + $0xe0] sm:$0xff]
  %v49 = vld [vmem:[%s2 + $0xe8] sm:$0xff]
  %v50 = vld [vmem:[%s2 + $0xf0] sm:$0xff]
  %v51 = vld [vmem:[%s2 + $0xf8] sm:$0xff]
  %v52 = vld [vmem:[%s2 + $0x100] sm:$0xff]
  %v53 = vld [vmem:[%s2 + $0x108] sm:$0xff]
  %v54 = vld [vmem:[%s2 + $0x110] sm:$0xff]
  %v55 = vld [vmem:[%s2 + $0x118] sm:$0xff]
  %v56 = vld [vmem:[%s2 + $0x120] sm:$0xff]
  %v57 = vld [vmem:[%s2 + $0x128] sm:$0xff]
  %v58 = vld [vmem:[%s2 + $0x130] sm:$0xff]
  %v59 = vld [vmem:[%s2 + $0x138] sm:$0xff]
  %v60 = vld [vmem:[%s2 + $0x140] sm:$0xff]
  %v61 = vld [vmem:[%s2 + $0x148] sm:$0xff]
  %v62 = vld [vmem:[%s2 + $0x150] sm:$0xff]
  %v63 = vld [vmem:[%s2 + $0x158] sm:$0xff]
  %v64 = vld [vmem:[%s2 + $0x160] sm:$0xff]
  %v65 = vld [vmem:[%s2 + $0x168] sm:$0xff]
  %v66 = vld [vmem:[%s2 + $0x170] sm:$0xff]
  %v67 = vld [vmem:[%s2 + $0x178] sm:$0xff]
  %v68 = vld [vmem:[%s2 + $0x180] sm:$0xff]
  %v69 = vld [vmem:[%s2 + $0x188] sm:$0xff]
  %v70 = vld [vmem:[%s2 + $0x190] sm:$0xff]
  %v71 = vld [vmem:[%s2 + $0x198] sm:$0xff]
  %v72 = vld [vmem:[%s2 + $0x1a0] sm:$0xff]
  %v73 = vld [vmem:[%s2 + $0x1a8] sm:$0xff]
  %v74 = vld [vmem:[%s2 + $0x1b0] sm:$0xff]
  %v75 = vld [vmem:[%s2 + $0x1b8] sm:$0xff]
  %v76 = vld [vmem:[%s2 + $0x1c0] sm:$0xff]
  %v77 = vld [vmem:[%s2 + $0x1c8] sm:$0xff]
  %v78 = vld [vmem:[%s2 + $0x1d0] sm:$0xff]
  %v79 = vld [vmem:[%s2 + $0x1d8] sm:$0xff]
  %v80 = vld [vmem:[%s2 + $0x1e0] sm:$0xff]
  %v81 = vld [vmem:[%s2 + $0x1e8] sm:$0xff]
  %v82 = vld [vmem:[%s2 + $0x1f0] sm:$0xff]
  %v83 = vld [vmem:[%s2 + $0x1f8] sm:$0xff]
  %v84 = vld [vmem:[%s2 + $0x200] sm:$0xff]
  %v85 = vld [vmem:[%s2 + $0x208] sm:$0xff]
  %v86 = vld [vmem:[%s2 + $0x210] sm:$0xff]
  %v87 = vld [vmem:[%s2 + $0x218] sm:$0xff]
  %v88 = vld [vmem:[%s2 + $0x220] sm:$0xff]
  %v89 = vld [vmem:[%s2 + $0x228] sm:$0xff]
  %v90 = vld [vmem:[%s2 + $0x230] sm:$0xff]
  %v91 = vld [vmem:[%s2 + $0x238] sm:$0xff]
  %v92 = vld [vmem:[%s2 + $0x240] sm:$0xff]
  %v93 = vld [vmem:[%s2 + $0x248] sm:$0xff]
  %v94 = vld [vmem:[%s2 + $0x250] sm:$0xff]
  %v95 = vld [vmem:[%s2 + $0x258] sm:$0xff]
  %v96 = vld [vmem:[%s2 + $0x260] sm:$0xff]
  %v97 = vld [vmem:[%s2 + $0x268] sm:$0xff]
  %v98 = vld [vmem:[%s2 + $0x270] sm:$0xff]
  %v99 = vld [vmem:[%s2 + $0x278] sm:$0xff]
  %v100 = vld [vmem:[%s2 + $0x280] sm:$0xff]
  %v101 = vld [vmem:[%s2 + $0x288] sm:$0xff]
  %v102 = vld [vmem:[%s2 + $0x290] sm:$0xff]
  %v103 = vld [vmem:[%s2 + $0x298] sm:$0xff]
  %v104 = vld [vmem:[%s2 + $0x2a0] sm:$0xff]
  %v105 = vld [vmem:[%s2 + $0x2a8] sm:$0xff]
  %v106 = vld [vmem:[%s2 + $0x2b0] sm:$0xff]
  %v107 = vld [vmem:[%s2 + $0x2b8] sm:$0xff]
  %v108 = vld [vmem:[%s2 + $0x2c0] sm:$0xff]
  %v109 = vld [vmem:[%s2 + $0x2c8] sm:$0xff]
  %v110 = vld [vmem:[%s2 + $0x2d0] sm:$0xff]
  %v111 = vld [vmem:[%s2 + $0x2d8] sm:$0xff]
  %v112 = vld [vmem:[%s2 + $0x2e0] sm:$0xff]
  %v113 = vld [vmem:[%s2 + $0x2e8] sm:$0xff]
  %v114 = vld [vmem:[%s2 + $0x2f0] sm:$0xff]
  %v115 = vld [vmem:[%s2 + $0x2f8] sm:$0xff]
  %v116 = vld [vmem:[%s1] sm:$0x3f]
  %v118 = vlaneseq
  %v119 = vshrl.u32 %v118, 7
  %v120 = vsub.s32 0, %v119
  %v121 = vrot.slane %v116, %v120
  %v122 = vlaneseq
  %v123 = vshrl.u32 %v122, 7
  %v124 = vsub.s32 1, %v123
  %v125 = vrot.slane %v116, %v124
  %v126 = vlaneseq
  %v127 = vshrl.u32 %v126, 7
  %v128 = vsub.s32 2, %v127
  %v129 = vrot.slane %v116, %v128
  %v130 = vlaneseq
  %v131 = vshrl.u32 %v130, 7
  %v132 = vsub.s32 3, %v131
  %v133 = vrot.slane %v116, %v132
  %v134 = vlaneseq
  %v135 = vshrl.u32 %v134, 7
  %v136 = vsub.s32 4, %v135
  %v137 = vrot.slane %v116, %v136
  %v138 = vlaneseq
  %v139 = vshrl.u32 %v138, 7
  %v140 = vsub.s32 5, %v139
  %v141 = vrot.slane %v116, %v140
  %v148 = vmul.f32 %v20, %v121
  %v149 = vmul.f32 %v21, %v125
  %v150 = vmul.f32 %v22, %v129
  %v151 = vmul.f32 %v23, %v133
  %v152 = vmul.f32 %v24, %v137
  %v153 = vmul.f32 %v25, %v141
  %v154 = vmul.f32 %v26, %v121
  %v155 = vmul.f32 %v27, %v125
  %v156 = vmul.f32 %v28, %v129
  %v157 = vmul.f32 %v29, %v133
  %v158 = vmul.f32 %v30, %v137
  %v159 = vmul.f32 %v31, %v141
  %v160 = vmul.f32 %v32, %v121
  %v161 = vmul.f32 %v33, %v125
  %v162 = vmul.f32 %v34, %v129
  %v163 = vmul.f32 %v35, %v133
  %v164 = vmul.f32 %v36, %v137
  %v165 = vmul.f32 %v37, %v141
  %v166 = vmul.f32 %v38, %v121
  %v167 = vmul.f32 %v39, %v125
  %v168 = vmul.f32 %v40, %v129
  %v169 = vmul.f32 %v41, %v133
  %v170 = vmul.f32 %v42, %v137
  %v171 = vmul.f32 %v43, %v141
  %v172 = vmul.f32 %v44, %v121
  %v173 = vmul.f32 %v45, %v125
  %v174 = vmul.f32 %v46, %v129
  %v175 = vmul.f32 %v47, %v133
  %v176 = vmul.f32 %v48, %v137
  %v177 = vmul.f32 %v49, %v141
  %v178 = vmul.f32 %v50, %v121
  %v179 = vmul.f32 %v51, %v125
  %v180 = vmul.f32 %v52, %v129
  %v181 = vmul.f32 %v53, %v133
  %v182 = vmul.f32 %v54, %v137
  %v183 = vmul.f32 %v55, %v141
  %v184 = vmul.f32 %v56, %v121
  %v185 = vmul.f32 %v57, %v125
  %v186 = vmul.f32 %v58, %v129
  %v187 = vmul.f32 %v59, %v133
  %v188 = vmul.f32 %v60, %v137
  %v189 = vmul.f32 %v61, %v141
  %v190 = vmul.f32 %v62, %v121
  %v191 = vmul.f32 %v63, %v125
  %v192 = vmul.f32 %v64, %v129
  %v193 = vmul.f32 %v65, %v133
  %v194 = vmul.f32 %v66, %v137
  %v195 = vmul.f32 %v67, %v141
  %v196 = vmul.f32 %v68, %v121
  %v197 = vmul.f32 %v69, %v125
  %v198 = vmul.f32 %v70, %v129
  %v199 = vmul.f32 %v71, %v133
  %v200 = vmul.f32 %v72, %v137
  %v201 = vmul.f32 %v73, %v141
  %v202 = vmul.f32 %v74, %v121
  %v203 = vmul.f32 %v75, %v125
  %v204 = vmul.f32 %v76, %v129
  %v205 = vmul.f32 %v77, %v133
  %v206 = vmul.f32 %v78, %v137
  %v207 = vmul.f32 %v79, %v141
  %v208 = vmul.f32 %v80, %v121
  %v209 = vmul.f32 %v81, %v125
  %v210 = vmul.f32 %v82, %v129
  %v211 = vmul.f32 %v83, %v133
  %v212 = vmul.f32 %v84, %v137
  %v213 = vmul.f32 %v85, %v141
  %v214 = vmul.f32 %v86, %v121
  %v215 = vmul.f32 %v87, %v125
  %v216 = vmul.f32 %v88, %v129
  %v217 = vmul.f32 %v89, %v133
  %v218 = vmul.f32 %v90, %v137
  %v219 = vmul.f32 %v91, %v141
  %v220 = vmul.f32 %v92, %v121
  %v221 = vmul.f32 %v93, %v125
  %v222 = vmul.f32 %v94, %v129
  %v223 = vmul.f32 %v95, %v133
  %v224 = vmul.f32 %v96, %v137
  %v225 = vmul.f32 %v97, %v141
  %v226 = vmul.f32 %v98, %v121
  %v227 = vmul.f32 %v99, %v125
  %v228 = vmul.f32 %v100, %v129
  %v229 = vmul.f32 %v101, %v133
  %v230 = vmul.f32 %v102, %v137
  %v231 = vmul.f32 %v103, %v141
  %v232 = vmul.f32 %v104, %v121
  %v233 = vmul.f32 %v105, %v125
  %v234 = vmul.f32 %v106, %v129
  %v235 = vmul.f32 %v107, %v133
  %v236 = vmul.f32 %v108, %v137
  %v237 = vmul.f32 %v109, %v141
  %v238 = vmul.f32 %v110, %v121
  %v239 = vmul.f32 %v111, %v125
  %v240 = vmul.f32 %v112, %v129
  %v241 = vmul.f32 %v113, %v133
  %v242 = vmul.f32 %v114, %v137
  %v243 = vmul.f32 %v115, %v141
  %v244 = vpack.c.bf16 %v154, %v148
  %v245 = vpack.c.bf16 %v155, %v149
  %v246 = vpack.c.bf16 %v156, %v150
  %v247 = vpack.c.bf16 %v157, %v151
  %v248 = vpack.c.bf16 %v158, %v152
  %v249 = vpack.c.bf16 %v159, %v153
  %v250 = vpack.c.bf16 %v166, %v160
  %v251 = vpack.c.bf16 %v167, %v161
  %v252 = vpack.c.bf16 %v168, %v162
  %v253 = vpack.c.bf16 %v169, %v163
  %v254 = vpack.c.bf16 %v170, %v164
  %v255 = vpack.c.bf16 %v171, %v165
  %v256 = vpack.c.bf16 %v178, %v172
  %v257 = vpack.c.bf16 %v179, %v173
  %v258 = vpack.c.bf16 %v180, %v174
  %v259 = vpack.c.bf16 %v181, %v175
  %v260 = vpack.c.bf16 %v182, %v176
  %v261 = vpack.c.bf16 %v183, %v177
  %v262 = vpack.c.bf16 %v190, %v184
  %v263 = vpack.c.bf16 %v191, %v185
  %v264 = vpack.c.bf16 %v192, %v186
  %v265 = vpack.c.bf16 %v193, %v187
  %v266 = vpack.c.bf16 %v194, %v188
  %v267 = vpack.c.bf16 %v195, %v189
  %v268 = vpack.c.bf16 %v202, %v196
  %v269 = vpack.c.bf16 %v203, %v197
  %v270 = vpack.c.bf16 %v204, %v198
  %v271 = vpack.c.bf16 %v205, %v199
  %v272 = vpack.c.bf16 %v206, %v200
  %v273 = vpack.c.bf16 %v207, %v201
  %v274 = vpack.c.bf16 %v214, %v208
  %v275 = vpack.c.bf16 %v215, %v209
  %v276 = vpack.c.bf16 %v216, %v210
  %v277 = vpack.c.bf16 %v217, %v211
  %v278 = vpack.c.bf16 %v218, %v212
  %v279 = vpack.c.bf16 %v219, %v213
  %v280 = vpack.c.bf16 %v226, %v220
  %v281 = vpack.c.bf16 %v227, %v221
  %v282 = vpack.c.bf16 %v228, %v222
  %v283 = vpack.c.bf16 %v229, %v223
  %v284 = vpack.c.bf16 %v230, %v224
  %v285 = vpack.c.bf16 %v231, %v225
  %v286 = vpack.c.bf16 %v238, %v232
  %v287 = vpack.c.bf16 %v239, %v233
  %v288 = vpack.c.bf16 %v240, %v234
  %v289 = vpack.c.bf16 %v241, %v235
  %v290 = vpack.c.bf16 %v242, %v236
  %v291 = vpack.c.bf16 %v243, %v237
  %v292 = vld [vmem:[%s0] sm:$0xff]
  %v293 = vld [vmem:[%s0 + $0x8] sm:$0xff]
  %v294 = vld [vmem:[%s0 + $0x10] sm:$0xff]
  %v295 = vld [vmem:[%s0 + $0x18] sm:$0xff]
  %v296 = vld [vmem:[%s0 + $0x20] sm:$0xff]
  %v297 = vld [vmem:[%s0 + $0x28] sm:$0xff]
  %v298 = vld [vmem:[%s0 + $0x30] sm:$0xff]
  %v299 = vld [vmem:[%s0 + $0x38] sm:$0xff]
  %v300 = vld [vmem:[%s0 + $0x40] sm:$0xff]
  %v301 = vld [vmem:[%s0 + $0x48] sm:$0xff]
  %v302 = vld [vmem:[%s0 + $0x50] sm:$0xff]
  %v303 = vld [vmem:[%s0 + $0x58] sm:$0xff]
  %v304 = vld [vmem:[%s0 + $0x60] sm:$0xff]
  %v305 = vld [vmem:[%s0 + $0x68] sm:$0xff]
  %v306 = vld [vmem:[%s0 + $0x70] sm:$0xff]
  %v307 = vld [vmem:[%s0 + $0x78] sm:$0xff]
  %v308 = vld [vmem:[%s0 + $0x80] sm:$0xff]
  %v309 = vld [vmem:[%s0 + $0x88] sm:$0xff]
  %v310 = vld [vmem:[%s0 + $0x90] sm:$0xff]
  %v311 = vld [vmem:[%s0 + $0x98] sm:$0xff]
  %v312 = vld [vmem:[%s0 + $0xa0] sm:$0xff]
  %v313 = vld [vmem:[%s0 + $0xa8] sm:$0xff]
  %v314 = vld [vmem:[%s0 + $0xb0] sm:$0xff]
  %v315 = vld [vmem:[%s0 + $0xb8] sm:$0xff]
  %v316 = vld [vmem:[%s0 + $0xc0] sm:$0xff]
  %v317 = vld [vmem:[%s0 + $0xc8] sm:$0xff]
  %v318 = vld [vmem:[%s0 + $0xd0] sm:$0xff]
  %v319 = vld [vmem:[%s0 + $0xd8] sm:$0xff]
  %v320 = vld [vmem:[%s0 + $0xe0] sm:$0xff]
  %v321 = vld [vmem:[%s0 + $0xe8] sm:$0xff]
  %v322 = vld [vmem:[%s0 + $0xf0] sm:$0xff]
  %v323 = vld [vmem:[%s0 + $0xf8] sm:$0xff]
  %v324 = vld [vmem:[%s0 + $0x100] sm:$0xff]
  %v325 = vld [vmem:[%s0 + $0x108] sm:$0xff]
  %v326 = vld [vmem:[%s0 + $0x110] sm:$0xff]
  %v327 = vld [vmem:[%s0 + $0x118] sm:$0xff]
  %v328 = vld [vmem:[%s0 + $0x120] sm:$0xff]
  %v329 = vld [vmem:[%s0 + $0x128] sm:$0xff]
  %v330 = vld [vmem:[%s0 + $0x130] sm:$0xff]
  %v331 = vld [vmem:[%s0 + $0x138] sm:$0xff]
  %v332 = vld [vmem:[%s0 + $0x140] sm:$0xff]
  %v333 = vld [vmem:[%s0 + $0x148] sm:$0xff]
  %v334 = vld [vmem:[%s0 + $0x150] sm:$0xff]
  %v335 = vld [vmem:[%s0 + $0x158] sm:$0xff]
  %v336 = vld [vmem:[%s0 + $0x160] sm:$0xff]
  %v337 = vld [vmem:[%s0 + $0x168] sm:$0xff]
  %v338 = vld [vmem:[%s0 + $0x170] sm:$0xff]
  %v339 = vld [vmem:[%s0 + $0x178] sm:$0xff]
  %v340 = vld [vmem:[%s0 + $0x180] sm:$0xff]
  %v341 = vld [vmem:[%s0 + $0x188] sm:$0xff]
  %v342 = vld [vmem:[%s0 + $0x190] sm:$0xff]
  %v343 = vld [vmem:[%s0 + $0x198] sm:$0xff]
  %v344 = vld [vmem:[%s0 + $0x1a0] sm:$0xff]
  %v345 = vld [vmem:[%s0 + $0x1a8] sm:$0xff]
  %v346 = vld [vmem:[%s0 + $0x1b0] sm:$0xff]
  %v347 = vld [vmem:[%s0 + $0x1b8] sm:$0xff]
  %v348 = vld [vmem:[%s0 + $0x1c0] sm:$0xff]
  %v349 = vld [vmem:[%s0 + $0x1c8] sm:$0xff]
  %v350 = vld [vmem:[%s0 + $0x1d0] sm:$0xff]
  %v351 = vld [vmem:[%s0 + $0x1d8] sm:$0xff]
  %v352 = vld [vmem:[%s0 + $0x1e0] sm:$0xff]
  %v353 = vld [vmem:[%s0 + $0x1e8] sm:$0xff]
  %v354 = vld [vmem:[%s0 + $0x1f0] sm:$0xff]
  %v355 = vld [vmem:[%s0 + $0x1f8] sm:$0xff]
  %v356 = vld [vmem:[%s0 + $0x200] sm:$0xff]
  %v357 = vld [vmem:[%s0 + $0x208] sm:$0xff]
  %v358 = vld [vmem:[%s0 + $0x210] sm:$0xff]
  %v359 = vld [vmem:[%s0 + $0x218] sm:$0xff]
  %v360 = vld [vmem:[%s0 + $0x220] sm:$0xff]
  %v361 = vld [vmem:[%s0 + $0x228] sm:$0xff]
  %v362 = vld [vmem:[%s0 + $0x230] sm:$0xff]
  %v363 = vld [vmem:[%s0 + $0x238] sm:$0xff]
  %v364 = vld [vmem:[%s0 + $0x240] sm:$0xff]
  %v365 = vld [vmem:[%s0 + $0x248] sm:$0xff]
  %v366 = vld [vmem:[%s0 + $0x250] sm:$0xff]
  %v367 = vld [vmem:[%s0 + $0x258] sm:$0xff]
  %v368 = vld [vmem:[%s0 + $0x260] sm:$0xff]
  %v369 = vld [vmem:[%s0 + $0x268] sm:$0xff]
  %v370 = vld [vmem:[%s0 + $0x270] sm:$0xff]
  %v371 = vld [vmem:[%s0 + $0x278] sm:$0xff]
  %v372 = vld [vmem:[%s0 + $0x280] sm:$0xff]
  %v373 = vld [vmem:[%s0 + $0x288] sm:$0xff]
  %v374 = vld [vmem:[%s0 + $0x290] sm:$0xff]
  %v375 = vld [vmem:[%s0 + $0x298] sm:$0xff]
  %v376 = vld [vmem:[%s0 + $0x2a0] sm:$0xff]
  %v377 = vld [vmem:[%s0 + $0x2a8] sm:$0xff]
  %v378 = vld [vmem:[%s0 + $0x2b0] sm:$0xff]
  %v379 = vld [vmem:[%s0 + $0x2b8] sm:$0xff]
  %v380 = vld [vmem:[%s0 + $0x2c0] sm:$0xff]
  %v381 = vld [vmem:[%s0 + $0x2c8] sm:$0xff]
  %v382 = vld [vmem:[%s0 + $0x2d0] sm:$0xff]
  %v383 = vld [vmem:[%s0 + $0x2d8] sm:$0xff]
  %v384 = vld [vmem:[%s0 + $0x2e0] sm:$0xff]
  %v385 = vld [vmem:[%s0 + $0x2e8] sm:$0xff]
  %v386 = vld [vmem:[%s0 + $0x2f0] sm:$0xff]
  %v387 = vld [vmem:[%s0 + $0x2f8] sm:$0xff]
  %v388 = vld [vmem:[%s0 + $0x300] sm:$0xff]
  %v389 = vld [vmem:[%s0 + $0x308] sm:$0xff]
  %v390 = vld [vmem:[%s0 + $0x310] sm:$0xff]
  %v391 = vld [vmem:[%s0 + $0x318] sm:$0xff]
  %v392 = vld [vmem:[%s0 + $0x320] sm:$0xff]
  %v393 = vld [vmem:[%s0 + $0x328] sm:$0xff]
  %v394 = vld [vmem:[%s0 + $0x330] sm:$0xff]
  %v395 = vld [vmem:[%s0 + $0x338] sm:$0xff]
  %v396 = vld [vmem:[%s0 + $0x340] sm:$0xff]
  %v397 = vld [vmem:[%s0 + $0x348] sm:$0xff]
  %v398 = vld [vmem:[%s0 + $0x350] sm:$0xff]
  %v399 = vld [vmem:[%s0 + $0x358] sm:$0xff]
  %v400 = vld [vmem:[%s0 + $0x360] sm:$0xff]
  %v401 = vld [vmem:[%s0 + $0x368] sm:$0xff]
  %v402 = vld [vmem:[%s0 + $0x370] sm:$0xff]
  %v403 = vld [vmem:[%s0 + $0x378] sm:$0xff]
  %v404 = vld [vmem:[%s0 + $0x380] sm:$0xff]
  %v405 = vld [vmem:[%s0 + $0x388] sm:$0xff]
  %v406 = vld [vmem:[%s0 + $0x390] sm:$0xff]
  %v407 = vld [vmem:[%s0 + $0x398] sm:$0xff]
  %v408 = vld [vmem:[%s0 + $0x3a0] sm:$0xff]
  %v409 = vld [vmem:[%s0 + $0x3a8] sm:$0xff]
  %v410 = vld [vmem:[%s0 + $0x3b0] sm:$0xff]
  %v411 = vld [vmem:[%s0 + $0x3b8] sm:$0xff]
  %v412 = vld [vmem:[%s0 + $0x3c0] sm:$0xff]
  %v413 = vld [vmem:[%s0 + $0x3c8] sm:$0xff]
  %v414 = vld [vmem:[%s0 + $0x3d0] sm:$0xff]
  %v415 = vld [vmem:[%s0 + $0x3d8] sm:$0xff]
  %v416 = vld [vmem:[%s0 + $0x3e0] sm:$0xff]
  %v417 = vld [vmem:[%s0 + $0x3e8] sm:$0xff]
  %v418 = vld [vmem:[%s0 + $0x3f0] sm:$0xff]
  %v419 = vld [vmem:[%s0 + $0x3f8] sm:$0xff]
  %v420 = vld [vmem:[%s0 + $0x400] sm:$0xff]
  %v421 = vld [vmem:[%s0 + $0x408] sm:$0xff]
  %v422 = vld [vmem:[%s0 + $0x410] sm:$0xff]
  %v423 = vld [vmem:[%s0 + $0x418] sm:$0xff]
  %v424 = vld [vmem:[%s0 + $0x420] sm:$0xff]
  %v425 = vld [vmem:[%s0 + $0x428] sm:$0xff]
  %v426 = vld [vmem:[%s0 + $0x430] sm:$0xff]
  %v427 = vld [vmem:[%s0 + $0x438] sm:$0xff]
  %v428 = vld [vmem:[%s0 + $0x440] sm:$0xff]
  %v429 = vld [vmem:[%s0 + $0x448] sm:$0xff]
  %v430 = vld [vmem:[%s0 + $0x450] sm:$0xff]
  %v431 = vld [vmem:[%s0 + $0x458] sm:$0xff]
  %v432 = vld [vmem:[%s0 + $0x460] sm:$0xff]
  %v433 = vld [vmem:[%s0 + $0x468] sm:$0xff]
  %v434 = vld [vmem:[%s0 + $0x470] sm:$0xff]
  %v435 = vld [vmem:[%s0 + $0x478] sm:$0xff]
  %v436 = vld [vmem:[%s0 + $0x480] sm:$0xff]
  %v437 = vld [vmem:[%s0 + $0x488] sm:$0xff]
  %v438 = vld [vmem:[%s0 + $0x490] sm:$0xff]
  %v439 = vld [vmem:[%s0 + $0x498] sm:$0xff]
  %v440 = vld [vmem:[%s0 + $0x4a0] sm:$0xff]
  %v441 = vld [vmem:[%s0 + $0x4a8] sm:$0xff]
  %v442 = vld [vmem:[%s0 + $0x4b0] sm:$0xff]
  %v443 = vld [vmem:[%s0 + $0x4b8] sm:$0xff]
  %v444 = vld [vmem:[%s0 + $0x4c0] sm:$0xff]
  %v445 = vld [vmem:[%s0 + $0x4c8] sm:$0xff]
  %v446 = vld [vmem:[%s0 + $0x4d0] sm:$0xff]
  %v447 = vld [vmem:[%s0 + $0x4d8] sm:$0xff]
  %v448 = vld [vmem:[%s0 + $0x4e0] sm:$0xff]
  %v449 = vld [vmem:[%s0 + $0x4e8] sm:$0xff]
  %v450 = vld [vmem:[%s0 + $0x4f0] sm:$0xff]
  %v451 = vld [vmem:[%s0 + $0x4f8] sm:$0xff]
  %v452 = vld [vmem:[%s0 + $0x500] sm:$0xff]
  %v453 = vld [vmem:[%s0 + $0x508] sm:$0xff]
  %v454 = vld [vmem:[%s0 + $0x510] sm:$0xff]
  %v455 = vld [vmem:[%s0 + $0x518] sm:$0xff]
  %v456 = vld [vmem:[%s0 + $0x520] sm:$0xff]
  %v457 = vld [vmem:[%s0 + $0x528] sm:$0xff]
  %v458 = vld [vmem:[%s0 + $0x530] sm:$0xff]
  %v459 = vld [vmem:[%s0 + $0x538] sm:$0xff]
  %v460 = vld [vmem:[%s0 + $0x540] sm:$0xff]
  %v461 = vld [vmem:[%s0 + $0x548] sm:$0xff]
  %v462 = vld [vmem:[%s0 + $0x550] sm:$0xff]
  %v463 = vld [vmem:[%s0 + $0x558] sm:$0xff]
  %v464 = vld [vmem:[%s0 + $0x560] sm:$0xff]
  %v465 = vld [vmem:[%s0 + $0x568] sm:$0xff]
  %v466 = vld [vmem:[%s0 + $0x570] sm:$0xff]
  %v467 = vld [vmem:[%s0 + $0x578] sm:$0xff]
  %v468 = vld [vmem:[%s0 + $0x580] sm:$0xff]
  %v469 = vld [vmem:[%s0 + $0x588] sm:$0xff]
  %v470 = vld [vmem:[%s0 + $0x590] sm:$0xff]
  %v471 = vld [vmem:[%s0 + $0x598] sm:$0xff]
  %v472 = vld [vmem:[%s0 + $0x5a0] sm:$0xff]
  %v473 = vld [vmem:[%s0 + $0x5a8] sm:$0xff]
  %v474 = vld [vmem:[%s0 + $0x5b0] sm:$0xff]
  %v475 = vld [vmem:[%s0 + $0x5b8] sm:$0xff]
  %v476 = vld [vmem:[%s0 + $0x5c0] sm:$0xff]
  %v477 = vld [vmem:[%s0 + $0x5c8] sm:$0xff]
  %v478 = vld [vmem:[%s0 + $0x5d0] sm:$0xff]
  %v479 = vld [vmem:[%s0 + $0x5d8] sm:$0xff]
  %v480 = vld [vmem:[%s0 + $0x5e0] sm:$0xff]
  %v481 = vld [vmem:[%s0 + $0x5e8] sm:$0xff]
  %v482 = vld [vmem:[%s0 + $0x5f0] sm:$0xff]
  %v483 = vld [vmem:[%s0 + $0x5f8] sm:$0xff]
  %v484 = vpack.c.bf16 %v294, %v292
  %v485 = vpack.c.bf16 %v295, %v293
  %v486 = vpack.c.bf16 %v298, %v296
  %v487 = vpack.c.bf16 %v299, %v297
  %v488 = vpack.c.bf16 %v302, %v300
  %v489 = vpack.c.bf16 %v303, %v301
  %v490 = vpack.c.bf16 %v306, %v304
  %v491 = vpack.c.bf16 %v307, %v305
  %v492 = vpack.c.bf16 %v310, %v308
  %v493 = vpack.c.bf16 %v311, %v309
  %v494 = vpack.c.bf16 %v314, %v312
  %v495 = vpack.c.bf16 %v315, %v313
  %v496 = vpack.c.bf16 %v318, %v316
  %v497 = vpack.c.bf16 %v319, %v317
  %v498 = vpack.c.bf16 %v322, %v320
  %v499 = vpack.c.bf16 %v323, %v321
  %v500 = vpack.c.bf16 %v326, %v324
  %v501 = vpack.c.bf16 %v327, %v325
  %v502 = vpack.c.bf16 %v330, %v328
  %v503 = vpack.c.bf16 %v331, %v329
  %v504 = vpack.c.bf16 %v334, %v332
  %v505 = vpack.c.bf16 %v335, %v333
  %v506 = vpack.c.bf16 %v338, %v336
  %v507 = vpack.c.bf16 %v339, %v337
  %v508 = vpack.c.bf16 %v342, %v340
  %v509 = vpack.c.bf16 %v343, %v341
  %v510 = vpack.c.bf16 %v346, %v344
  %v511 = vpack.c.bf16 %v347, %v345
  %v512 = vpack.c.bf16 %v350, %v348
  %v513 = vpack.c.bf16 %v351, %v349
  %v514 = vpack.c.bf16 %v354, %v352
  %v515 = vpack.c.bf16 %v355, %v353
  %v516 = vpack.c.bf16 %v358, %v356
  %v517 = vpack.c.bf16 %v359, %v357
  %v518 = vpack.c.bf16 %v362, %v360
  %v519 = vpack.c.bf16 %v363, %v361
  %v520 = vpack.c.bf16 %v366, %v364
  %v521 = vpack.c.bf16 %v367, %v365
  %v522 = vpack.c.bf16 %v370, %v368
  %v523 = vpack.c.bf16 %v371, %v369
  %v524 = vpack.c.bf16 %v374, %v372
  %v525 = vpack.c.bf16 %v375, %v373
  %v526 = vpack.c.bf16 %v378, %v376
  %v527 = vpack.c.bf16 %v379, %v377
  %v528 = vpack.c.bf16 %v382, %v380
  %v529 = vpack.c.bf16 %v383, %v381
  %v530 = vpack.c.bf16 %v386, %v384
  %v531 = vpack.c.bf16 %v387, %v385
  %v532 = vpack.c.bf16 %v390, %v388
  %v533 = vpack.c.bf16 %v391, %v389
  %v534 = vpack.c.bf16 %v394, %v392
  %v535 = vpack.c.bf16 %v395, %v393
  %v536 = vpack.c.bf16 %v398, %v396
  %v537 = vpack.c.bf16 %v399, %v397
  %v538 = vpack.c.bf16 %v402, %v400
  %v539 = vpack.c.bf16 %v403, %v401
  %v540 = vpack.c.bf16 %v406, %v404
  %v541 = vpack.c.bf16 %v407, %v405
  %v542 = vpack.c.bf16 %v410, %v408
  %v543 = vpack.c.bf16 %v411, %v409
  %v544 = vpack.c.bf16 %v414, %v412
  %v545 = vpack.c.bf16 %v415, %v413
  %v546 = vpack.c.bf16 %v418, %v416
  %v547 = vpack.c.bf16 %v419, %v417
  %v548 = vpack.c.bf16 %v422, %v420
  %v549 = vpack.c.bf16 %v423, %v421
  %v550 = vpack.c.bf16 %v426, %v424
  %v551 = vpack.c.bf16 %v427, %v425
  %v552 = vpack.c.bf16 %v430, %v428
  %v553 = vpack.c.bf16 %v431, %v429
  %v554 = vpack.c.bf16 %v434, %v432
  %v555 = vpack.c.bf16 %v435, %v433
  %v556 = vpack.c.bf16 %v438, %v436
  %v557 = vpack.c.bf16 %v439, %v437
  %v558 = vpack.c.bf16 %v442, %v440
  %v559 = vpack.c.bf16 %v443, %v441
  %v560 = vpack.c.bf16 %v446, %v444
  %v561 = vpack.c.bf16 %v447, %v445
  %v562 = vpack.c.bf16 %v450, %v448
  %v563 = vpack.c.bf16 %v451, %v449
  %v564 = vpack.c.bf16 %v454, %v452
  %v565 = vpack.c.bf16 %v455, %v453
  %v566 = vpack.c.bf16 %v458, %v456
  %v567 = vpack.c.bf16 %v459, %v457
  %v568 = vpack.c.bf16 %v462, %v460
  %v569 = vpack.c.bf16 %v463, %v461
  %v570 = vpack.c.bf16 %v466, %v464
  %v571 = vpack.c.bf16 %v467, %v465
  %v572 = vpack.c.bf16 %v470, %v468
  %v573 = vpack.c.bf16 %v471, %v469
  %v574 = vpack.c.bf16 %v474, %v472
  %v575 = vpack.c.bf16 %v475, %v473
  %v576 = vpack.c.bf16 %v478, %v476
  %v577 = vpack.c.bf16 %v479, %v477
  %v578 = vpack.c.bf16 %v482, %v480
  %v579 = vpack.c.bf16 %v483, %v481
  %580 = vmatprep.subr.bf16.mxu0 %v499
  %581 = vmatpush1.bf16.msra.mxu0 %v498
  %582 = vmatprep.subr.bf16.mxu0 %v497
  %583 = vmatpush1.bf16.msra.mxu0 %v496
  %584 = vmatprep.subr.bf16.mxu0 %v495
  %585 = vmatpush1.bf16.msra.mxu0 %v494
  %586 = vmatprep.subr.bf16.mxu0 %v493
  %587 = vmatpush1.bf16.msra.mxu0 %v492
  %588 = vmatprep.subr.bf16.mxu0 %v491
  %589 = vmatpush1.bf16.msra.mxu0 %v490
  %590 = vmatprep.subr.bf16.mxu0 %v489
  %591 = vmatpush1.bf16.msra.mxu0 %v488
  %592 = vmatprep.subr.bf16.mxu0 %v487
  %593 = vmatpush1.bf16.msra.mxu0 %v486
  %594 = vmatprep.subr.bf16.mxu0 %v485
  %595 = vmatpush1.bf16.msra.mxu0 %v484
  %596 = vmatprep.subr.bf16.mxu0 %v515
  %597 = vmatpush2.bf16.msra.mxu0 %v514
  %598 = vmatprep.subr.bf16.mxu0 %v513
  %599 = vmatpush2.bf16.msra.mxu0 %v512
  %600 = vmatprep.subr.bf16.mxu0 %v511
  %601 = vmatpush2.bf16.msra.mxu0 %v510
  %602 = vmatprep.subr.bf16.mxu0 %v509
  %603 = vmatpush2.bf16.msra.mxu0 %v508
  %604 = vmatprep.subr.bf16.mxu0 %v507
  %605 = vmatpush2.bf16.msra.mxu0 %v506
  %606 = vmatprep.subr.bf16.mxu0 %v505
  %607 = vmatpush2.bf16.msra.mxu0 %v504
  %608 = vmatprep.subr.bf16.mxu0 %v503
  %609 = vmatpush2.bf16.msra.mxu0 %v502
  %610 = vmatprep.subr.bf16.mxu0 %v501
  %611 = vmatpush2.bf16.msra.mxu0 %v500
  %612 = vmatprep.mubr.bf16.mxu0 %v245
  %613 = vmatmul.mubr.bf16.gmra.mxu0 %v244
  %v614 = vpop.f32.mrf.mxu0
  %v615 = vadd.f32 0.0, %v614
  %v616 = vpop.f32.mrf.mxu0
  %v617 = vadd.f32 0.0, %v616
  %v618 = vpop.f32.mrf.mxu0
  %v619 = vadd.f32 0.0, %v618
  %v620 = vpop.f32.mrf.mxu0
  %v621 = vadd.f32 0.0, %v620
  %622 = vmatprep.mubr.bf16.mxu0 %v251
  %623 = vmatmul.mubr.bf16.gmra.mxu0 %v250
  %v624 = vpop.f32.mrf.mxu0
  %v625 = vadd.f32 0.0, %v624
  %v626 = vpop.f32.mrf.mxu0
  %v627 = vadd.f32 0.0, %v626
  %v628 = vpop.f32.mrf.mxu0
  %v629 = vadd.f32 0.0, %v628
  %v630 = vpop.f32.mrf.mxu0
  %v631 = vadd.f32 0.0, %v630
  %632 = vmatprep.mubr.bf16.mxu0 %v257
  %633 = vmatmul.mubr.bf16.gmra.mxu0 %v256
  %v634 = vpop.f32.mrf.mxu0
  %v635 = vadd.f32 0.0, %v634
  %v636 = vpop.f32.mrf.mxu0
  %v637 = vadd.f32 0.0, %v636
  %v638 = vpop.f32.mrf.mxu0
  %v639 = vadd.f32 0.0, %v638
  %v640 = vpop.f32.mrf.mxu0
  %v641 = vadd.f32 0.0, %v640
  %642 = vmatprep.mubr.bf16.mxu0 %v263
  %643 = vmatmul.mubr.bf16.gmra.mxu0 %v262
  %v644 = vpop.f32.mrf.mxu0
  %v645 = vadd.f32 0.0, %v644
  %v646 = vpop.f32.mrf.mxu0
  %v647 = vadd.f32 0.0, %v646
  %v648 = vpop.f32.mrf.mxu0
  %v649 = vadd.f32 0.0, %v648
  %v650 = vpop.f32.mrf.mxu0
  %v651 = vadd.f32 0.0, %v650
  %652 = vmatprep.mubr.bf16.mxu0 %v269
  %653 = vmatmul.mubr.bf16.gmra.mxu0 %v268
  %v654 = vpop.f32.mrf.mxu0
  %v655 = vadd.f32 0.0, %v654
  %v656 = vpop.f32.mrf.mxu0
  %v657 = vadd.f32 0.0, %v656
  %v658 = vpop.f32.mrf.mxu0
  %v659 = vadd.f32 0.0, %v658
  %v660 = vpop.f32.mrf.mxu0
  %v661 = vadd.f32 0.0, %v660
  %662 = vmatprep.mubr.bf16.mxu0 %v275
  %663 = vmatmul.mubr.bf16.gmra.mxu0 %v274
  %v664 = vpop.f32.mrf.mxu0
  %v665 = vadd.f32 0.0, %v664
  %v666 = vpop.f32.mrf.mxu0
  %v667 = vadd.f32 0.0, %v666
  %v668 = vpop.f32.mrf.mxu0
  %v669 = vadd.f32 0.0, %v668
  %v670 = vpop.f32.mrf.mxu0
  %v671 = vadd.f32 0.0, %v670
  %672 = vmatprep.mubr.bf16.mxu0 %v281
  %673 = vmatmul.mubr.bf16.gmra.mxu0 %v280
  %v674 = vpop.f32.mrf.mxu0
  %v675 = vadd.f32 0.0, %v674
  %v676 = vpop.f32.mrf.mxu0
  %v677 = vadd.f32 0.0, %v676
  %v678 = vpop.f32.mrf.mxu0
  %v679 = vadd.f32 0.0, %v678
  %v680 = vpop.f32.mrf.mxu0
  %v681 = vadd.f32 0.0, %v680
  %682 = vmatprep.mubr.bf16.mxu0 %v287
  %683 = vmatmul.mubr.bf16.gmra.mxu0 %v286
  %v684 = vpop.f32.mrf.mxu0
  %v685 = vadd.f32 0.0, %v684
  %v686 = vpop.f32.mrf.mxu0
  %v687 = vadd.f32 0.0, %v686
  %v688 = vpop.f32.mrf.mxu0
  %v689 = vadd.f32 0.0, %v688
  %v690 = vpop.f32.mrf.mxu0
  %v691 = vadd.f32 0.0, %v690
  %692 = vdwg.mxu0
  %693 = vmatprep.subr.bf16.mxu0 %v531
  %694 = vmatpush1.bf16.msra.mxu0 %v530
  %695 = vmatprep.subr.bf16.mxu0 %v529
  %696 = vmatpush1.bf16.msra.mxu0 %v528
  %697 = vmatprep.subr.bf16.mxu0 %v527
  %698 = vmatpush1.bf16.msra.mxu0 %v526
  %699 = vmatprep.subr.bf16.mxu0 %v525
  %700 = vmatpush1.bf16.msra.mxu0 %v524
  %701 = vmatprep.subr.bf16.mxu0 %v523
  %702 = vmatpush1.bf16.msra.mxu0 %v522
  %703 = vmatprep.subr.bf16.mxu0 %v521
  %704 = vmatpush1.bf16.msra.mxu0 %v520
  %705 = vmatprep.subr.bf16.mxu0 %v519
  %706 = vmatpush1.bf16.msra.mxu0 %v518
  %707 = vmatprep.subr.bf16.mxu0 %v517
  %708 = vmatpush1.bf16.msra.mxu0 %v516
  %709 = vmatprep.subr.bf16.mxu0 %v547
  %710 = vmatpush2.bf16.msra.mxu0 %v546
  %711 = vmatprep.subr.bf16.mxu0 %v545
  %712 = vmatpush2.bf16.msra.mxu0 %v544
  %713 = vmatprep.subr.bf16.mxu0 %v543
  %714 = vmatpush2.bf16.msra.mxu0 %v542
  %715 = vmatprep.subr.bf16.mxu0 %v541
  %716 = vmatpush2.bf16.msra.mxu0 %v540
  %717 = vmatprep.subr.bf16.mxu0 %v539
  %718 = vmatpush2.bf16.msra.mxu0 %v538
  %719 = vmatprep.subr.bf16.mxu0 %v537
  %720 = vmatpush2.bf16.msra.mxu0 %v536
  %721 = vmatprep.subr.bf16.mxu0 %v535
  %722 = vmatpush2.bf16.msra.mxu0 %v534
  %723 = vmatprep.subr.bf16.mxu0 %v533
  %724 = vmatpush2.bf16.msra.mxu0 %v532
  %725 = vmatprep.mubr.bf16.mxu0 %v247
  %726 = vmatmul.mubr.bf16.gmra.mxu0 %v246
  %v727 = vpop.f32.mrf.mxu0
  %v728 = vadd.f32 %v615, %v727
  %v729 = vpop.f32.mrf.mxu0
  %v730 = vadd.f32 %v617, %v729
  %v731 = vpop.f32.mrf.mxu0
  %v732 = vadd.f32 %v619, %v731
  %v733 = vpop.f32.mrf.mxu0
  %v734 = vadd.f32 %v621, %v733
  %735 = vmatprep.mubr.bf16.mxu0 %v253
  %736 = vmatmul.mubr.bf16.gmra.mxu0 %v252
  %v737 = vpop.f32.mrf.mxu0
  %v738 = vadd.f32 %v625, %v737
  %v739 = vpop.f32.mrf.mxu0
  %v740 = vadd.f32 %v627, %v739
  %v741 = vpop.f32.mrf.mxu0
  %v742 = vadd.f32 %v629, %v741
  %v743 = vpop.f32.mrf.mxu0
  %v744 = vadd.f32 %v631, %v743
  %745 = vmatprep.mubr.bf16.mxu0 %v259
  %746 = vmatmul.mubr.bf16.gmra.mxu0 %v258
  %v747 = vpop.f32.mrf.mxu0
  %v748 = vadd.f32 %v635, %v747
  %v749 = vpop.f32.mrf.mxu0
  %v750 = vadd.f32 %v637, %v749
  %v751 = vpop.f32.mrf.mxu0
  %v752 = vadd.f32 %v639, %v751
  %v753 = vpop.f32.mrf.mxu0
  %v754 = vadd.f32 %v641, %v753
  %755 = vmatprep.mubr.bf16.mxu0 %v265
  %756 = vmatmul.mubr.bf16.gmra.mxu0 %v264
  %v757 = vpop.f32.mrf.mxu0
  %v758 = vadd.f32 %v645, %v757
  %v759 = vpop.f32.mrf.mxu0
  %v760 = vadd.f32 %v647, %v759
  %v761 = vpop.f32.mrf.mxu0
  %v762 = vadd.f32 %v649, %v761
  %v763 = vpop.f32.mrf.mxu0
  %v764 = vadd.f32 %v651, %v763
  %765 = vmatprep.mubr.bf16.mxu0 %v271
  %766 = vmatmul.mubr.bf16.gmra.mxu0 %v270
  %v767 = vpop.f32.mrf.mxu0
  %v768 = vadd.f32 %v655, %v767
  %v769 = vpop.f32.mrf.mxu0
  %v770 = vadd.f32 %v657, %v769
  %v771 = vpop.f32.mrf.mxu0
  %v772 = vadd.f32 %v659, %v771
  %v773 = vpop.f32.mrf.mxu0
  %v774 = vadd.f32 %v661, %v773
  %775 = vmatprep.mubr.bf16.mxu0 %v277
  %776 = vmatmul.mubr.bf16.gmra.mxu0 %v276
  %v777 = vpop.f32.mrf.mxu0
  %v778 = vadd.f32 %v665, %v777
  %v779 = vpop.f32.mrf.mxu0
  %v780 = vadd.f32 %v667, %v779
  %v781 = vpop.f32.mrf.mxu0
  %v782 = vadd.f32 %v669, %v781
  %v783 = vpop.f32.mrf.mxu0
  %v784 = vadd.f32 %v671, %v783
  %785 = vmatprep.mubr.bf16.mxu0 %v283
  %786 = vmatmul.mubr.bf16.gmra.mxu0 %v282
  %v787 = vpop.f32.mrf.mxu0
  %v788 = vadd.f32 %v675, %v787
  %v789 = vpop.f32.mrf.mxu0
  %v790 = vadd.f32 %v677, %v789
  %v791 = vpop.f32.mrf.mxu0
  %v792 = vadd.f32 %v679, %v791
  %v793 = vpop.f32.mrf.mxu0
  %v794 = vadd.f32 %v681, %v793
  %795 = vmatprep.mubr.bf16.mxu0 %v289
  %796 = vmatmul.mubr.bf16.gmra.mxu0 %v288
  %v797 = vpop.f32.mrf.mxu0
  %v798 = vadd.f32 %v685, %v797
  %v799 = vpop.f32.mrf.mxu0
  %v800 = vadd.f32 %v687, %v799
  %v801 = vpop.f32.mrf.mxu0
  %v802 = vadd.f32 %v689, %v801
  %v803 = vpop.f32.mrf.mxu0
  %v804 = vadd.f32 %v691, %v803
  %805 = vdwg.mxu0
  %806 = vmatprep.subr.bf16.mxu0 %v563
  %807 = vmatpush1.bf16.msra.mxu0 %v562
  %808 = vmatprep.subr.bf16.mxu0 %v561
  %809 = vmatpush1.bf16.msra.mxu0 %v560
  %810 = vmatprep.subr.bf16.mxu0 %v559
  %811 = vmatpush1.bf16.msra.mxu0 %v558
  %812 = vmatprep.subr.bf16.mxu0 %v557
  %813 = vmatpush1.bf16.msra.mxu0 %v556
  %814 = vmatprep.subr.bf16.mxu0 %v555
  %815 = vmatpush1.bf16.msra.mxu0 %v554
  %816 = vmatprep.subr.bf16.mxu0 %v553
  %817 = vmatpush1.bf16.msra.mxu0 %v552
  %818 = vmatprep.subr.bf16.mxu0 %v551
  %819 = vmatpush1.bf16.msra.mxu0 %v550
  %820 = vmatprep.subr.bf16.mxu0 %v549
  %821 = vmatpush1.bf16.msra.mxu0 %v548
  %822 = vmatprep.subr.bf16.mxu0 %v579
  %823 = vmatpush2.bf16.msra.mxu0 %v578
  %824 = vmatprep.subr.bf16.mxu0 %v577
  %825 = vmatpush2.bf16.msra.mxu0 %v576
  %826 = vmatprep.subr.bf16.mxu0 %v575
  %827 = vmatpush2.bf16.msra.mxu0 %v574
  %828 = vmatprep.subr.bf16.mxu0 %v573
  %829 = vmatpush2.bf16.msra.mxu0 %v572
  %830 = vmatprep.subr.bf16.mxu0 %v571
  %831 = vmatpush2.bf16.msra.mxu0 %v570
  %832 = vmatprep.subr.bf16.mxu0 %v569
  %833 = vmatpush2.bf16.msra.mxu0 %v568
  %834 = vmatprep.subr.bf16.mxu0 %v567
  %835 = vmatpush2.bf16.msra.mxu0 %v566
  %836 = vmatprep.subr.bf16.mxu0 %v565
  %837 = vmatpush2.bf16.msra.mxu0 %v564
  %838 = vmatprep.mubr.bf16.mxu0 %v249
  %839 = vmatmul.mubr.bf16.gmra.mxu0 %v248
  %v840 = vpop.f32.mrf.mxu0
  %v841 = vadd.f32 %v728, %v840
  %v842 = vpop.f32.mrf.mxu0
  %v843 = vadd.f32 %v730, %v842
  %v844 = vpop.f32.mrf.mxu0
  %v845 = vadd.f32 %v732, %v844
  %v846 = vpop.f32.mrf.mxu0
  %v847 = vadd.f32 %v734, %v846
  %848 = vmatprep.mubr.bf16.mxu0 %v255
  %849 = vmatmul.mubr.bf16.gmra.mxu0 %v254
  %v850 = vpop.f32.mrf.mxu0
  %v851 = vadd.f32 %v738, %v850
  %v852 = vpop.f32.mrf.mxu0
  %v853 = vadd.f32 %v740, %v852
  %v854 = vpop.f32.mrf.mxu0
  %v855 = vadd.f32 %v742, %v854
  %v856 = vpop.f32.mrf.mxu0
  %v857 = vadd.f32 %v744, %v856
  %858 = vmatprep.mubr.bf16.mxu0 %v261
  %859 = vmatmul.mubr.bf16.gmra.mxu0 %v260
  %v860 = vpop.f32.mrf.mxu0
  %v861 = vadd.f32 %v748, %v860
  %v862 = vpop.f32.mrf.mxu0
  %v863 = vadd.f32 %v750, %v862
  %v864 = vpop.f32.mrf.mxu0
  %v865 = vadd.f32 %v752, %v864
  %v866 = vpop.f32.mrf.mxu0
  %v867 = vadd.f32 %v754, %v866
  %868 = vmatprep.mubr.bf16.mxu0 %v267
  %869 = vmatmul.mubr.bf16.gmra.mxu0 %v266
  %v870 = vpop.f32.mrf.mxu0
  %v871 = vadd.f32 %v758, %v870
  %v872 = vpop.f32.mrf.mxu0
  %v873 = vadd.f32 %v760, %v872
  %v874 = vpop.f32.mrf.mxu0
  %v875 = vadd.f32 %v762, %v874
  %v876 = vpop.f32.mrf.mxu0
  %v877 = vadd.f32 %v764, %v876
  %878 = vmatprep.mubr.bf16.mxu0 %v273
  %879 = vmatmul.mubr.bf16.gmra.mxu0 %v272
  %v880 = vpop.f32.mrf.mxu0
  %v881 = vadd.f32 %v768, %v880
  %v882 = vpop.f32.mrf.mxu0
  %v883 = vadd.f32 %v770, %v882
  %v884 = vpop.f32.mrf.mxu0
  %v885 = vadd.f32 %v772, %v884
  %v886 = vpop.f32.mrf.mxu0
  %v887 = vadd.f32 %v774, %v886
  %888 = vmatprep.mubr.bf16.mxu0 %v279
  %889 = vmatmul.mubr.bf16.gmra.mxu0 %v278
  %v890 = vpop.f32.mrf.mxu0
  %v891 = vadd.f32 %v778, %v890
  %v892 = vpop.f32.mrf.mxu0
  %v893 = vadd.f32 %v780, %v892
  %v894 = vpop.f32.mrf.mxu0
  %v895 = vadd.f32 %v782, %v894
  %v896 = vpop.f32.mrf.mxu0
  %v897 = vadd.f32 %v784, %v896
  %898 = vmatprep.mubr.bf16.mxu0 %v285
  %899 = vmatmul.mubr.bf16.gmra.mxu0 %v284
  %v900 = vpop.f32.mrf.mxu0
  %v901 = vadd.f32 %v788, %v900
  %v902 = vpop.f32.mrf.mxu0
  %v903 = vadd.f32 %v790, %v902
  %v904 = vpop.f32.mrf.mxu0
  %v905 = vadd.f32 %v792, %v904
  %v906 = vpop.f32.mrf.mxu0
  %v907 = vadd.f32 %v794, %v906
  %908 = vmatprep.mubr.bf16.mxu0 %v291
  %909 = vmatmul.mubr.bf16.gmra.mxu0 %v290
  %v910 = vpop.f32.mrf.mxu0
  %v911 = vadd.f32 %v798, %v910
  %v912 = vpop.f32.mrf.mxu0
  %v913 = vadd.f32 %v800, %v912
  %v914 = vpop.f32.mrf.mxu0
  %v915 = vadd.f32 %v802, %v914
  %v916 = vpop.f32.mrf.mxu0
  %v917 = vadd.f32 %v804, %v916
  %918 = vdwg.mxu0
  %vm919 = vcmask 556032
  %v920 = vsel %vm919, %v843, 0.0
  %v921 = vadd.f32 %v841, %v920
  %922 = vadd.xlane.f32.xlu0 %v921
  %v923 = vpop.xlane.xlu0 %922
  %v924 = vsel %vm919, %v847, 0.0
  %v925 = vadd.f32 %v845, %v924
  %926 = vadd.xlane.f32.xlu0 %v925
  %v927 = vpop.xlane.xlu0 %926
  %v928 = vsel %vm919, %v853, 0.0
  %v929 = vadd.f32 %v851, %v928
  %930 = vadd.xlane.f32.xlu0 %v929
  %v931 = vpop.xlane.xlu0 %930
  %v932 = vsel %vm919, %v857, 0.0
  %v933 = vadd.f32 %v855, %v932
  %934 = vadd.xlane.f32.xlu0 %v933
  %v935 = vpop.xlane.xlu0 %934
  %v936 = vsel %vm919, %v863, 0.0
  %v937 = vadd.f32 %v861, %v936
  %938 = vadd.xlane.f32.xlu0 %v937
  %v939 = vpop.xlane.xlu0 %938
  %v940 = vsel %vm919, %v867, 0.0
  %v941 = vadd.f32 %v865, %v940
  %942 = vadd.xlane.f32.xlu0 %v941
  %v943 = vpop.xlane.xlu0 %942
  %v944 = vsel %vm919, %v873, 0.0
  %v945 = vadd.f32 %v871, %v944
  %946 = vadd.xlane.f32.xlu0 %v945
  %v947 = vpop.xlane.xlu0 %946
  %v948 = vsel %vm919, %v877, 0.0
  %v949 = vadd.f32 %v875, %v948
  %950 = vadd.xlane.f32.xlu0 %v949
  %v951 = vpop.xlane.xlu0 %950
  %v952 = vsel %vm919, %v883, 0.0
  %v953 = vadd.f32 %v881, %v952
  %954 = vadd.xlane.f32.xlu0 %v953
  %v955 = vpop.xlane.xlu0 %954
  %v956 = vsel %vm919, %v887, 0.0
  %v957 = vadd.f32 %v885, %v956
  %958 = vadd.xlane.f32.xlu0 %v957
  %v959 = vpop.xlane.xlu0 %958
  %v960 = vsel %vm919, %v893, 0.0
  %v961 = vadd.f32 %v891, %v960
  %962 = vadd.xlane.f32.xlu0 %v961
  %v963 = vpop.xlane.xlu0 %962
  %v964 = vsel %vm919, %v897, 0.0
  %v965 = vadd.f32 %v895, %v964
  %966 = vadd.xlane.f32.xlu0 %v965
  %v967 = vpop.xlane.xlu0 %966
  %v968 = vsel %vm919, %v903, 0.0
  %v969 = vadd.f32 %v901, %v968
  %970 = vadd.xlane.f32.xlu0 %v969
  %v971 = vpop.xlane.xlu0 %970
  %v972 = vsel %vm919, %v907, 0.0
  %v973 = vadd.f32 %v905, %v972
  %974 = vadd.xlane.f32.xlu0 %v973
  %v975 = vpop.xlane.xlu0 %974
  %v976 = vsel %vm919, %v913, 0.0
  %v977 = vadd.f32 %v911, %v976
  %978 = vadd.xlane.f32.xlu0 %v977
  %v979 = vpop.xlane.xlu0 %978
  %v980 = vsel %vm919, %v917, 0.0
  %v981 = vadd.f32 %v915, %v980
  %982 = vadd.xlane.f32.xlu0 %v981
  %v983 = vpop.xlane.xlu0 %982
  %v984 = vmul.f32 %v841, %v841
  %v985 = vmul.f32 %v843, %v843
  %v986 = vmul.f32 %v845, %v845
  %v987 = vmul.f32 %v847, %v847
  %v988 = vmul.f32 %v851, %v851
  %v989 = vmul.f32 %v853, %v853
  %v990 = vmul.f32 %v855, %v855
  %v991 = vmul.f32 %v857, %v857
  %v992 = vmul.f32 %v861, %v861
  %v993 = vmul.f32 %v863, %v863
  %v994 = vmul.f32 %v865, %v865
  %v995 = vmul.f32 %v867, %v867
  %v996 = vmul.f32 %v871, %v871
  %v997 = vmul.f32 %v873, %v873
  %v998 = vmul.f32 %v875, %v875
  %v999 = vmul.f32 %v877, %v877
  %v1000 = vmul.f32 %v881, %v881
  %v1001 = vmul.f32 %v883, %v883
  %v1002 = vmul.f32 %v885, %v885
  %v1003 = vmul.f32 %v887, %v887
  %v1004 = vmul.f32 %v891, %v891
  %v1005 = vmul.f32 %v893, %v893
  %v1006 = vmul.f32 %v895, %v895
  %v1007 = vmul.f32 %v897, %v897
  %v1008 = vmul.f32 %v901, %v901
  %v1009 = vmul.f32 %v903, %v903
  %v1010 = vmul.f32 %v905, %v905
  %v1011 = vmul.f32 %v907, %v907
  %v1012 = vmul.f32 %v911, %v911
  %v1013 = vmul.f32 %v913, %v913
  %v1014 = vmul.f32 %v915, %v915
  %v1015 = vmul.f32 %v917, %v917
  %v1016 = vsel %vm919, %v985, 0.0
  %v1017 = vadd.f32 %v984, %v1016
  %1018 = vadd.xlane.f32.xlu0 %v1017
  %v1019 = vpop.xlane.xlu0 %1018
  %v1020 = vsel %vm919, %v987, 0.0
  %v1021 = vadd.f32 %v986, %v1020
  %1022 = vadd.xlane.f32.xlu0 %v1021
  %v1023 = vpop.xlane.xlu0 %1022
  %v1024 = vsel %vm919, %v989, 0.0
  %v1025 = vadd.f32 %v988, %v1024
  %1026 = vadd.xlane.f32.xlu0 %v1025
  %v1027 = vpop.xlane.xlu0 %1026
  %v1028 = vsel %vm919, %v991, 0.0
  %v1029 = vadd.f32 %v990, %v1028
  %1030 = vadd.xlane.f32.xlu0 %v1029
  %v1031 = vpop.xlane.xlu0 %1030
  %v1032 = vsel %vm919, %v993, 0.0
  %v1033 = vadd.f32 %v992, %v1032
  %1034 = vadd.xlane.f32.xlu0 %v1033
  %v1035 = vpop.xlane.xlu0 %1034
  %v1036 = vsel %vm919, %v995, 0.0
  %v1037 = vadd.f32 %v994, %v1036
  %1038 = vadd.xlane.f32.xlu0 %v1037
  %v1039 = vpop.xlane.xlu0 %1038
  %v1040 = vsel %vm919, %v997, 0.0
  %v1041 = vadd.f32 %v996, %v1040
  %1042 = vadd.xlane.f32.xlu0 %v1041
  %v1043 = vpop.xlane.xlu0 %1042
  %v1044 = vsel %vm919, %v999, 0.0
  %v1045 = vadd.f32 %v998, %v1044
  %1046 = vadd.xlane.f32.xlu0 %v1045
  %v1047 = vpop.xlane.xlu0 %1046
  %v1048 = vsel %vm919, %v1001, 0.0
  %v1049 = vadd.f32 %v1000, %v1048
  %1050 = vadd.xlane.f32.xlu0 %v1049
  %v1051 = vpop.xlane.xlu0 %1050
  %v1052 = vsel %vm919, %v1003, 0.0
  %v1053 = vadd.f32 %v1002, %v1052
  %1054 = vadd.xlane.f32.xlu0 %v1053
  %v1055 = vpop.xlane.xlu0 %1054
  %v1056 = vsel %vm919, %v1005, 0.0
  %v1057 = vadd.f32 %v1004, %v1056
  %1058 = vadd.xlane.f32.xlu0 %v1057
  %v1059 = vpop.xlane.xlu0 %1058
  %v1060 = vsel %vm919, %v1007, 0.0
  %v1061 = vadd.f32 %v1006, %v1060
  %1062 = vadd.xlane.f32.xlu0 %v1061
  %v1063 = vpop.xlane.xlu0 %1062
  %v1064 = vsel %vm919, %v1009, 0.0
  %v1065 = vadd.f32 %v1008, %v1064
  %1066 = vadd.xlane.f32.xlu0 %v1065
  %v1067 = vpop.xlane.xlu0 %1066
  %v1068 = vsel %vm919, %v1011, 0.0
  %v1069 = vadd.f32 %v1010, %v1068
  %1070 = vadd.xlane.f32.xlu0 %v1069
  %v1071 = vpop.xlane.xlu0 %1070
  %v1072 = vsel %vm919, %v1013, 0.0
  %v1073 = vadd.f32 %v1012, %v1072
  %1074 = vadd.xlane.f32.xlu0 %v1073
  %v1075 = vpop.xlane.xlu0 %1074
  %v1076 = vsel %vm919, %v1015, 0.0
  %v1077 = vadd.f32 %v1014, %v1076
  %1078 = vadd.xlane.f32.xlu0 %v1077
  %v1079 = vpop.xlane.xlu0 %1078
  %v1080 = vmul.f32 %v923, 0.0051020407
  %v1081 = vmul.f32 %v927, 0.0051020407
  %v1082 = vmul.f32 %v931, 0.0051020407
  %v1083 = vmul.f32 %v935, 0.0051020407
  %v1084 = vmul.f32 %v939, 0.0051020407
  %v1085 = vmul.f32 %v943, 0.0051020407
  %v1086 = vmul.f32 %v947, 0.0051020407
  %v1087 = vmul.f32 %v951, 0.0051020407
  %v1088 = vmul.f32 %v955, 0.0051020407
  %v1089 = vmul.f32 %v959, 0.0051020407
  %v1090 = vmul.f32 %v963, 0.0051020407
  %v1091 = vmul.f32 %v967, 0.0051020407
  %v1092 = vmul.f32 %v971, 0.0051020407
  %v1093 = vmul.f32 %v975, 0.0051020407
  %v1094 = vmul.f32 %v979, 0.0051020407
  %v1095 = vmul.f32 %v983, 0.0051020407
  %v1096 = vmul.f32 %v1019, 0.0051020407
  %v1097 = vmul.f32 %v1023, 0.0051020407
  %v1098 = vmul.f32 %v1027, 0.0051020407
  %v1099 = vmul.f32 %v1031, 0.0051020407
  %v1100 = vmul.f32 %v1035, 0.0051020407
  %v1101 = vmul.f32 %v1039, 0.0051020407
  %v1102 = vmul.f32 %v1043, 0.0051020407
  %v1103 = vmul.f32 %v1047, 0.0051020407
  %v1104 = vmul.f32 %v1051, 0.0051020407
  %v1105 = vmul.f32 %v1055, 0.0051020407
  %v1106 = vmul.f32 %v1059, 0.0051020407
  %v1107 = vmul.f32 %v1063, 0.0051020407
  %v1108 = vmul.f32 %v1067, 0.0051020407
  %v1109 = vmul.f32 %v1071, 0.0051020407
  %v1110 = vmul.f32 %v1075, 0.0051020407
  %v1111 = vmul.f32 %v1079, 0.0051020407
  %v1112 = vmul.f32 %v1080, %v1080
  %v1113 = vmul.f32 %v1081, %v1081
  %v1114 = vmul.f32 %v1082, %v1082
  %v1115 = vmul.f32 %v1083, %v1083
  %v1116 = vmul.f32 %v1084, %v1084
  %v1117 = vmul.f32 %v1085, %v1085
  %v1118 = vmul.f32 %v1086, %v1086
  %v1119 = vmul.f32 %v1087, %v1087
  %v1120 = vmul.f32 %v1088, %v1088
  %v1121 = vmul.f32 %v1089, %v1089
  %v1122 = vmul.f32 %v1090, %v1090
  %v1123 = vmul.f32 %v1091, %v1091
  %v1124 = vmul.f32 %v1092, %v1092
  %v1125 = vmul.f32 %v1093, %v1093
  %v1126 = vmul.f32 %v1094, %v1094
  %v1127 = vmul.f32 %v1095, %v1095
  %v1128 = vsub.f32 %v1096, %v1112
  %v1129 = vsub.f32 %v1097, %v1113
  %v1130 = vsub.f32 %v1098, %v1114
  %v1131 = vsub.f32 %v1099, %v1115
  %v1132 = vsub.f32 %v1100, %v1116
  %v1133 = vsub.f32 %v1101, %v1117
  %v1134 = vsub.f32 %v1102, %v1118
  %v1135 = vsub.f32 %v1103, %v1119
  %v1136 = vsub.f32 %v1104, %v1120
  %v1137 = vsub.f32 %v1105, %v1121
  %v1138 = vsub.f32 %v1106, %v1122
  %v1139 = vsub.f32 %v1107, %v1123
  %v1140 = vsub.f32 %v1108, %v1124
  %v1141 = vsub.f32 %v1109, %v1125
  %v1142 = vsub.f32 %v1110, %v1126
  %v1143 = vsub.f32 %v1111, %v1127
  %v1144 = vmax.f32 %v1128, 0.0
  %v1145 = vmax.f32 %v1129, 0.0
  %v1146 = vmax.f32 %v1130, 0.0
  %v1147 = vmax.f32 %v1131, 0.0
  %v1148 = vmax.f32 %v1132, 0.0
  %v1149 = vmax.f32 %v1133, 0.0
  %v1150 = vmax.f32 %v1134, 0.0
  %v1151 = vmax.f32 %v1135, 0.0
  %v1152 = vmax.f32 %v1136, 0.0
  %v1153 = vmax.f32 %v1137, 0.0
  %v1154 = vmax.f32 %v1138, 0.0
  %v1155 = vmax.f32 %v1139, 0.0
  %v1156 = vmax.f32 %v1140, 0.0
  %v1157 = vmax.f32 %v1141, 0.0
  %v1158 = vmax.f32 %v1142, 0.0
  %v1159 = vmax.f32 %v1143, 0.0
  %v1160 = vadd.f32 %v1144, 1e-05
  %v1161 = vadd.f32 %v1145, 1e-05
  %v1162 = vadd.f32 %v1146, 1e-05
  %v1163 = vadd.f32 %v1147, 1e-05
  %v1164 = vadd.f32 %v1148, 1e-05
  %v1165 = vadd.f32 %v1149, 1e-05
  %v1166 = vadd.f32 %v1150, 1e-05
  %v1167 = vadd.f32 %v1151, 1e-05
  %v1168 = vadd.f32 %v1152, 1e-05
  %v1169 = vadd.f32 %v1153, 1e-05
  %v1170 = vadd.f32 %v1154, 1e-05
  %v1171 = vadd.f32 %v1155, 1e-05
  %v1172 = vadd.f32 %v1156, 1e-05
  %v1173 = vadd.f32 %v1157, 1e-05
  %v1174 = vadd.f32 %v1158, 1e-05
  %v1175 = vadd.f32 %v1159, 1e-05
  %v1176 = vrsqrt.pop %v1160
  %v1177 = vrsqrt.pop %v1161
  %v1178 = vrsqrt.pop %v1162
  %v1179 = vrsqrt.pop %v1163
  %v1180 = vrsqrt.pop %v1164
  %v1181 = vrsqrt.pop %v1165
  %v1182 = vrsqrt.pop %v1166
  %v1183 = vrsqrt.pop %v1167
  %v1184 = vrsqrt.pop %v1168
  %v1185 = vrsqrt.pop %v1169
  %v1186 = vrsqrt.pop %v1170
  %v1187 = vrsqrt.pop %v1171
  %v1188 = vrsqrt.pop %v1172
  %v1189 = vrsqrt.pop %v1173
  %v1190 = vrsqrt.pop %v1174
  %v1191 = vrsqrt.pop %v1175
  %v1192 = vld [vmem:[%s3] sm:$0xff]
  %v1193 = vld [vmem:[%s3 + $0x8] sm:$0xff]
  %v1194 = vld [vmem:[%s3 + $0x10] sm:$0xff]
  %v1195 = vld [vmem:[%s3 + $0x18] sm:$0xff]
  %v1196 = vld [vmem:[%s3 + $0x20] sm:$0xff]
  %v1197 = vld [vmem:[%s3 + $0x28] sm:$0xff]
  %v1198 = vld [vmem:[%s3 + $0x30] sm:$0xff]
  %v1199 = vld [vmem:[%s3 + $0x38] sm:$0xff]
  %v1200 = vld [vmem:[%s3 + $0x40] sm:$0xff]
  %v1201 = vld [vmem:[%s3 + $0x48] sm:$0xff]
  %v1202 = vld [vmem:[%s3 + $0x50] sm:$0xff]
  %v1203 = vld [vmem:[%s3 + $0x58] sm:$0xff]
  %v1204 = vld [vmem:[%s3 + $0x60] sm:$0xff]
  %v1205 = vld [vmem:[%s3 + $0x68] sm:$0xff]
  %v1206 = vld [vmem:[%s3 + $0x70] sm:$0xff]
  %v1207 = vld [vmem:[%s3 + $0x78] sm:$0xff]
  %v1208 = vmul.f32 %v1176, %v1192
  %v1209 = vmul.f32 %v1177, %v1193
  %v1210 = vmul.f32 %v1178, %v1194
  %v1211 = vmul.f32 %v1179, %v1195
  %v1212 = vmul.f32 %v1180, %v1196
  %v1213 = vmul.f32 %v1181, %v1197
  %v1214 = vmul.f32 %v1182, %v1198
  %v1215 = vmul.f32 %v1183, %v1199
  %v1216 = vmul.f32 %v1184, %v1200
  %v1217 = vmul.f32 %v1185, %v1201
  %v1218 = vmul.f32 %v1186, %v1202
  %v1219 = vmul.f32 %v1187, %v1203
  %v1220 = vmul.f32 %v1188, %v1204
  %v1221 = vmul.f32 %v1189, %v1205
  %v1222 = vmul.f32 %v1190, %v1206
  %v1223 = vmul.f32 %v1191, %v1207
  %v1224 = vld [vmem:[%s4] sm:$0xff]
  %v1225 = vld [vmem:[%s4 + $0x8] sm:$0xff]
  %v1226 = vld [vmem:[%s4 + $0x10] sm:$0xff]
  %v1227 = vld [vmem:[%s4 + $0x18] sm:$0xff]
  %v1228 = vld [vmem:[%s4 + $0x20] sm:$0xff]
  %v1229 = vld [vmem:[%s4 + $0x28] sm:$0xff]
  %v1230 = vld [vmem:[%s4 + $0x30] sm:$0xff]
  %v1231 = vld [vmem:[%s4 + $0x38] sm:$0xff]
  %v1232 = vld [vmem:[%s4 + $0x40] sm:$0xff]
  %v1233 = vld [vmem:[%s4 + $0x48] sm:$0xff]
  %v1234 = vld [vmem:[%s4 + $0x50] sm:$0xff]
  %v1235 = vld [vmem:[%s4 + $0x58] sm:$0xff]
  %v1236 = vld [vmem:[%s4 + $0x60] sm:$0xff]
  %v1237 = vld [vmem:[%s4 + $0x68] sm:$0xff]
  %v1238 = vld [vmem:[%s4 + $0x70] sm:$0xff]
  %v1239 = vld [vmem:[%s4 + $0x78] sm:$0xff]
  %v1240 = vmul.f32 %v1080, %v1208
  %v1241 = vmul.f32 %v1081, %v1209
  %v1242 = vmul.f32 %v1082, %v1210
  %v1243 = vmul.f32 %v1083, %v1211
  %v1244 = vmul.f32 %v1084, %v1212
  %v1245 = vmul.f32 %v1085, %v1213
  %v1246 = vmul.f32 %v1086, %v1214
  %v1247 = vmul.f32 %v1087, %v1215
  %v1248 = vmul.f32 %v1088, %v1216
  %v1249 = vmul.f32 %v1089, %v1217
  %v1250 = vmul.f32 %v1090, %v1218
  %v1251 = vmul.f32 %v1091, %v1219
  %v1252 = vmul.f32 %v1092, %v1220
  %v1253 = vmul.f32 %v1093, %v1221
  %v1254 = vmul.f32 %v1094, %v1222
  %v1255 = vmul.f32 %v1095, %v1223
  %v1256 = vsub.f32 %v1224, %v1240
  %v1257 = vsub.f32 %v1225, %v1241
  %v1258 = vsub.f32 %v1226, %v1242
  %v1259 = vsub.f32 %v1227, %v1243
  %v1260 = vsub.f32 %v1228, %v1244
  %v1261 = vsub.f32 %v1229, %v1245
  %v1262 = vsub.f32 %v1230, %v1246
  %v1263 = vsub.f32 %v1231, %v1247
  %v1264 = vsub.f32 %v1232, %v1248
  %v1265 = vsub.f32 %v1233, %v1249
  %v1266 = vsub.f32 %v1234, %v1250
  %v1267 = vsub.f32 %v1235, %v1251
  %v1268 = vsub.f32 %v1236, %v1252
  %v1269 = vsub.f32 %v1237, %v1253
  %v1270 = vsub.f32 %v1238, %v1254
  %v1271 = vsub.f32 %v1239, %v1255
  %1273 = vset.pattern.permute.xlu0 0
  %1274 = vperm.xlu0 %1273, %v1208
  %v1275 = vpop.permute.xlu0 %1274
  %1278 = vset.pattern.permute.xlu0 0
  %1279 = vperm.xlu0 %1278, %v1209
  %v1280 = vpop.permute.xlu0 %1279
  %1283 = vset.pattern.permute.xlu0 0
  %1284 = vperm.xlu0 %1283, %v1210
  %v1285 = vpop.permute.xlu0 %1284
  %1288 = vset.pattern.permute.xlu0 0
  %1289 = vperm.xlu0 %1288, %v1211
  %v1290 = vpop.permute.xlu0 %1289
  %1293 = vset.pattern.permute.xlu0 0
  %1294 = vperm.xlu0 %1293, %v1212
  %v1295 = vpop.permute.xlu0 %1294
  %1298 = vset.pattern.permute.xlu0 0
  %1299 = vperm.xlu0 %1298, %v1213
  %v1300 = vpop.permute.xlu0 %1299
  %1303 = vset.pattern.permute.xlu0 0
  %1304 = vperm.xlu0 %1303, %v1214
  %v1305 = vpop.permute.xlu0 %1304
  %1308 = vset.pattern.permute.xlu0 0
  %1309 = vperm.xlu0 %1308, %v1215
  %v1310 = vpop.permute.xlu0 %1309
  %1313 = vset.pattern.permute.xlu0 0
  %1314 = vperm.xlu0 %1313, %v1216
  %v1315 = vpop.permute.xlu0 %1314
  %1318 = vset.pattern.permute.xlu0 0
  %1319 = vperm.xlu0 %1318, %v1217
  %v1320 = vpop.permute.xlu0 %1319
  %1323 = vset.pattern.permute.xlu0 0
  %1324 = vperm.xlu0 %1323, %v1218
  %v1325 = vpop.permute.xlu0 %1324
  %1328 = vset.pattern.permute.xlu0 0
  %1329 = vperm.xlu0 %1328, %v1219
  %v1330 = vpop.permute.xlu0 %1329
  %1333 = vset.pattern.permute.xlu0 0
  %1334 = vperm.xlu0 %1333, %v1220
  %v1335 = vpop.permute.xlu0 %1334
  %1338 = vset.pattern.permute.xlu0 0
  %1339 = vperm.xlu0 %1338, %v1221
  %v1340 = vpop.permute.xlu0 %1339
  %1343 = vset.pattern.permute.xlu0 0
  %1344 = vperm.xlu0 %1343, %v1222
  %v1345 = vpop.permute.xlu0 %1344
  %1348 = vset.pattern.permute.xlu0 0
  %1349 = vperm.xlu0 %1348, %v1223
  %v1350 = vpop.permute.xlu0 %1349
  %v1352 = vmul.f32 %v841, %v1275
  %v1353 = vmul.f32 %v843, %v1275
  %v1354 = vmul.f32 %v845, %v1280
  %v1355 = vmul.f32 %v847, %v1280
  %v1356 = vmul.f32 %v851, %v1285
  %v1357 = vmul.f32 %v853, %v1285
  %v1358 = vmul.f32 %v855, %v1290
  %v1359 = vmul.f32 %v857, %v1290
  %v1360 = vmul.f32 %v861, %v1295
  %v1361 = vmul.f32 %v863, %v1295
  %v1362 = vmul.f32 %v865, %v1300
  %v1363 = vmul.f32 %v867, %v1300
  %v1364 = vmul.f32 %v871, %v1305
  %v1365 = vmul.f32 %v873, %v1305
  %v1366 = vmul.f32 %v875, %v1310
  %v1367 = vmul.f32 %v877, %v1310
  %v1368 = vmul.f32 %v881, %v1315
  %v1369 = vmul.f32 %v883, %v1315
  %v1370 = vmul.f32 %v885, %v1320
  %v1371 = vmul.f32 %v887, %v1320
  %v1372 = vmul.f32 %v891, %v1325
  %v1373 = vmul.f32 %v893, %v1325
  %v1374 = vmul.f32 %v895, %v1330
  %v1375 = vmul.f32 %v897, %v1330
  %v1376 = vmul.f32 %v901, %v1335
  %v1377 = vmul.f32 %v903, %v1335
  %v1378 = vmul.f32 %v905, %v1340
  %v1379 = vmul.f32 %v907, %v1340
  %v1380 = vmul.f32 %v911, %v1345
  %v1381 = vmul.f32 %v913, %v1345
  %v1382 = vmul.f32 %v915, %v1350
  %v1383 = vmul.f32 %v917, %v1350
  %1385 = vset.pattern.permute.xlu0 0
  %1386 = vperm.xlu0 %1385, %v1256
  %v1387 = vpop.permute.xlu0 %1386
  %1390 = vset.pattern.permute.xlu0 0
  %1391 = vperm.xlu0 %1390, %v1257
  %v1392 = vpop.permute.xlu0 %1391
  %1395 = vset.pattern.permute.xlu0 0
  %1396 = vperm.xlu0 %1395, %v1258
  %v1397 = vpop.permute.xlu0 %1396
  %1400 = vset.pattern.permute.xlu0 0
  %1401 = vperm.xlu0 %1400, %v1259
  %v1402 = vpop.permute.xlu0 %1401
  %1405 = vset.pattern.permute.xlu0 0
  %1406 = vperm.xlu0 %1405, %v1260
  %v1407 = vpop.permute.xlu0 %1406
  %1410 = vset.pattern.permute.xlu0 0
  %1411 = vperm.xlu0 %1410, %v1261
  %v1412 = vpop.permute.xlu0 %1411
  %1415 = vset.pattern.permute.xlu0 0
  %1416 = vperm.xlu0 %1415, %v1262
  %v1417 = vpop.permute.xlu0 %1416
  %1420 = vset.pattern.permute.xlu0 0
  %1421 = vperm.xlu0 %1420, %v1263
  %v1422 = vpop.permute.xlu0 %1421
  %1425 = vset.pattern.permute.xlu0 0
  %1426 = vperm.xlu0 %1425, %v1264
  %v1427 = vpop.permute.xlu0 %1426
  %1430 = vset.pattern.permute.xlu0 0
  %1431 = vperm.xlu0 %1430, %v1265
  %v1432 = vpop.permute.xlu0 %1431
  %1435 = vset.pattern.permute.xlu0 0
  %1436 = vperm.xlu0 %1435, %v1266
  %v1437 = vpop.permute.xlu0 %1436
  %1440 = vset.pattern.permute.xlu0 0
  %1441 = vperm.xlu0 %1440, %v1267
  %v1442 = vpop.permute.xlu0 %1441
  %1445 = vset.pattern.permute.xlu0 0
  %1446 = vperm.xlu0 %1445, %v1268
  %v1447 = vpop.permute.xlu0 %1446
  %1450 = vset.pattern.permute.xlu0 0
  %1451 = vperm.xlu0 %1450, %v1269
  %v1452 = vpop.permute.xlu0 %1451
  %1455 = vset.pattern.permute.xlu0 0
  %1456 = vperm.xlu0 %1455, %v1270
  %v1457 = vpop.permute.xlu0 %1456
  %1460 = vset.pattern.permute.xlu0 0
  %1461 = vperm.xlu0 %1460, %v1271
  %v1462 = vpop.permute.xlu0 %1461
  %v1464 = vadd.f32 %v1352, %v1387
  %v1465 = vadd.f32 %v1353, %v1387
  %v1466 = vadd.f32 %v1354, %v1392
  %v1467 = vadd.f32 %v1355, %v1392
  %v1468 = vadd.f32 %v1356, %v1397
  %v1469 = vadd.f32 %v1357, %v1397
  %v1470 = vadd.f32 %v1358, %v1402
  %v1471 = vadd.f32 %v1359, %v1402
  %v1472 = vadd.f32 %v1360, %v1407
  %v1473 = vadd.f32 %v1361, %v1407
  %v1474 = vadd.f32 %v1362, %v1412
  %v1475 = vadd.f32 %v1363, %v1412
  %v1476 = vadd.f32 %v1364, %v1417
  %v1477 = vadd.f32 %v1365, %v1417
  %v1478 = vadd.f32 %v1366, %v1422
  %v1479 = vadd.f32 %v1367, %v1422
  %v1480 = vadd.f32 %v1368, %v1427
  %v1481 = vadd.f32 %v1369, %v1427
  %v1482 = vadd.f32 %v1370, %v1432
  %v1483 = vadd.f32 %v1371, %v1432
  %v1484 = vadd.f32 %v1372, %v1437
  %v1485 = vadd.f32 %v1373, %v1437
  %v1486 = vadd.f32 %v1374, %v1442
  %v1487 = vadd.f32 %v1375, %v1442
  %v1488 = vadd.f32 %v1376, %v1447
  %v1489 = vadd.f32 %v1377, %v1447
  %v1490 = vadd.f32 %v1378, %v1452
  %v1491 = vadd.f32 %v1379, %v1452
  %v1492 = vadd.f32 %v1380, %v1457
  %v1493 = vadd.f32 %v1381, %v1457
  %v1494 = vadd.f32 %v1382, %v1462
  %v1495 = vadd.f32 %v1383, %v1462
  %1496 = vst [vmem:[%s5] sm:$0xff] %v1464
  %1497 = vst.msk [vmem:[%s5 + $0x8] sm:$0xff] %vm919, %v1465
  %1498 = vst [vmem:[%s5 + $0x10] sm:$0xff] %v1466
  %1499 = vst.msk [vmem:[%s5 + $0x18] sm:$0xff] %vm919, %v1467
  %1500 = vst [vmem:[%s5 + $0x20] sm:$0xff] %v1468
  %1501 = vst.msk [vmem:[%s5 + $0x28] sm:$0xff] %vm919, %v1469
  %1502 = vst [vmem:[%s5 + $0x30] sm:$0xff] %v1470
  %1503 = vst.msk [vmem:[%s5 + $0x38] sm:$0xff] %vm919, %v1471
  %1504 = vst [vmem:[%s5 + $0x40] sm:$0xff] %v1472
  %1505 = vst.msk [vmem:[%s5 + $0x48] sm:$0xff] %vm919, %v1473
  %1506 = vst [vmem:[%s5 + $0x50] sm:$0xff] %v1474
  %1507 = vst.msk [vmem:[%s5 + $0x58] sm:$0xff] %vm919, %v1475
  %1508 = vst [vmem:[%s5 + $0x60] sm:$0xff] %v1476
  %1509 = vst.msk [vmem:[%s5 + $0x68] sm:$0xff] %vm919, %v1477
  %1510 = vst [vmem:[%s5 + $0x70] sm:$0xff] %v1478
  %1511 = vst.msk [vmem:[%s5 + $0x78] sm:$0xff] %vm919, %v1479
  %1512 = vst [vmem:[%s5 + $0x80] sm:$0xff] %v1480
  %1513 = vst.msk [vmem:[%s5 + $0x88] sm:$0xff] %vm919, %v1481
  %1514 = vst [vmem:[%s5 + $0x90] sm:$0xff] %v1482
  %1515 = vst.msk [vmem:[%s5 + $0x98] sm:$0xff] %vm919, %v1483
  %1516 = vst [vmem:[%s5 + $0xa0] sm:$0xff] %v1484
  %1517 = vst.msk [vmem:[%s5 + $0xa8] sm:$0xff] %vm919, %v1485
  %1518 = vst [vmem:[%s5 + $0xb0] sm:$0xff] %v1486
  %1519 = vst.msk [vmem:[%s5 + $0xb8] sm:$0xff] %vm919, %v1487
  %1520 = vst [vmem:[%s5 + $0xc0] sm:$0xff] %v1488
  %1521 = vst.msk [vmem:[%s5 + $0xc8] sm:$0xff] %vm919, %v1489
  %1522 = vst [vmem:[%s5 + $0xd0] sm:$0xff] %v1490
  %1523 = vst.msk [vmem:[%s5 + $0xd8] sm:$0xff] %vm919, %v1491
  %1524 = vst [vmem:[%s5 + $0xe0] sm:$0xff] %v1492
  %1525 = vst.msk [vmem:[%s5 + $0xe8] sm:$0xff] %vm919, %v1493
  %1526 = vst [vmem:[%s5 + $0xf0] sm:$0xff] %v1494
  %1527 = vst.msk [vmem:[%s5 + $0xf8] sm:$0xff] %vm919, %v1495
  // Predicated region
  $region22: #{tpu_custom_call.1} parent=0 // pred_check
    _
  $region23: #{tpu_custom_call.1} parent=0 // pred_check_branch
    %1529 = sbr.rel (0) target = $region25
  $region24: #{tpu_custom_call.1} parent=0 // pred_region
    _
  $region25: #{tpu_custom_call.1} parent=0 // pred_fallthru
    _
  // Predicated region
  $region26: #{tpu_custom_call.1} parent=0 // pred_check
    _
  $region27: #{tpu_custom_call.1} parent=0 // pred_check_branch
    %1531 = sbr.rel (0) target = $region29
  $region28: #{tpu_custom_call.1} parent=0 // pred_region
    _
  $region29: #{tpu_custom_call.1} parent=0 // pred_fallthru
    _

</llo_original>
